<compile_context>
chip_gen: v5e
topology: v5e:2x2
jax: 0.10.0
libtpu: 0.0.40
codegen_flags: <defaults>
</compile_context>

<pallas_src>
import numpy as np
import jax
import jax.numpy as jnp
from jax import lax
from jax.experimental import pallas as pl
from jax.experimental.pallas import tpu as pltpu


# ----------------------------------------------------------------------------
# Deterministic constants (the module has no learned weights).
# ----------------------------------------------------------------------------
def _gaussian_taps_1d(size=3, sigma=1.0):
    # torch.linspace(-size // 2, size // 2, size) == linspace(-2, 1, 3): the
    # taps are NOT symmetric, keep them exactly as the spec defines them.
    xv = np.linspace(-size // 2, size // 2, size)
    e = np.exp(-(xv ** 2) / (2.0 * sigma ** 2))
    return e / e.sum()


def _gaussian_kernel_2d(size=3, sigma=1.0):
    xv = np.linspace(-size // 2, size // 2, size)
    g = np.exp(-(xv[None, :] ** 2 + xv[:, None] ** 2) / (2.0 * sigma ** 2))
    return (g / g.sum()).astype(np.float32)


def _blur_matrix(n, a):
    """Banded matrix M so that (M @ v) == 1-D 3-tap filter `a` with reflect pad."""
    m = np.zeros((n, n), np.float32)
    for i in range(n):
        for d, w in zip((-1, 0, 1), a):
            j = i + d
            if j < 0:
                j = -j                      # reflect: -1 -> 1
            if j > n - 1:
                j = 2 * (n - 1) - j         # reflect: n -> n-2
            m[i, j] += w
    return m


def _dft_matrix(n):
    """Forward DFT matrix split into real / imaginary parts (symmetric)."""
    k = np.arange(n)
    ang = 2.0 * np.pi * np.outer(k, k) / n
    return np.cos(ang).astype(np.float32), (-np.sin(ang)).astype(np.float32)


# ----------------------------------------------------------------------------
# Pallas kernel: one (channel, batch) slab per grid step.
# ----------------------------------------------------------------------------
def _make_kernel(B, H, W, threshold, a_taps):
    a0, a1, a2 = (float(v) for v in a_taps)
    thr2 = float(threshold) * float(threshold)
    n_elem = float(B * H * W)
    freq_scale = 0.5 / float(H * W)          # 0.5 blend * 1/(H*W) IFFT norm

    def kernel(x_ref, fwr_ref, fwi_ref, fhr_ref, fhi_ref, bh_ref,
               out_ref, sx_ref, sxx_ref):
        b = pl.program_id(1)
        dot = lambda p, q: jnp.dot(p, q, preferred_element_type=jnp.float32)

        x = x_ref[...]                                   # (H, W) f32
        fwr = fwr_ref[...]; fwi = fwi_ref[...]           # (W, W) DFT real/imag
        fhr = fhr_ref[...]; fhi = fhi_ref[...]           # (H, H) DFT real/imag
        bh = bh_ref[...]                                 # (H, H) blur (x 0.5)

        # ---- per-channel moment accumulators (reset on first batch step) ----
        @pl.when(b == 0)
        def _():
            sx_ref[...] = jnp.zeros_like(sx_ref)
            sxx_ref[...] = jnp.zeros_like(sxx_ref)

        sx_ref[...] = sx_ref[...] + jnp.sum(x, keepdims=True)
        sxx_ref[...] = sxx_ref[...] + jnp.sum(x * x, keepdims=True)

        # ---- high-pass mask generated in-kernel (unshifted frequency order,
        #      0.5/(H*W) folded in).  ifftshift(mask_shifted)[i] = shifted[(i+n//2)%n].
        row = lax.broadcasted_iota(jnp.int32, (H, W), 0)
        col = lax.broadcasted_iota(jnp.int32, (H, W), 1)
        si = (row + H // 2) % H
        sj = (col + W // 2) % W
        yv = -1.0 + (2.0 / (H - 1)) * si.astype(jnp.float32)
        xv = -1.0 + (2.0 / (W - 1)) * sj.astype(jnp.float32)
        mask = jnp.where(xv * xv + yv * yv > thr2, freq_scale, 0.0)

        # ---- 2-D DFT -> mask -> inverse 2-D DFT (real part); all 2-D matmuls.
        cr = dot(x, fwr)                      # forward DFT along W (real input)
        ci = dot(x, fwi)
        yr = (dot(fhr, cr) - dot(fhi, ci)) * mask      # forward DFT along H
        yi = (dot(fhr, ci) + dot(fhi, cr)) * mask
        zr = dot(fhr, yr) + dot(fhi, yi)      # conj(Fh) @ Y  (inverse along H)
        zi = dot(fhr, yi) - dot(fhi, yr)
        x_filt = dot(zr, fwr) + dot(zi, fwi)  # real part of inverse along W

        # ---- separable reflect-pad 3-tap Gaussian blur.
        # W pass on the XLU/VPU: circular rolls + boundary selects.  The iota
        # probe makes this correct whichever rotate direction the HW uses.
        rA = pltpu.roll(x, 1, axis=1)
        rB = pltpu.roll(x, W - 1, axis=1)
        cA = pltpu.roll(col, 1, axis=1)
        a_is_prev = cA == (col + (W - 1)) % W           # all-true iff rA[j]==x[j-1]
        prev = jnp.where(a_is_prev, rA, rB)             # x[(j-1) % W]
        nxt = jnp.where(a_is_prev, rB, rA)              # x[(j+1) % W]
        left = jnp.where(col == 0, nxt, prev)           # reflect: x[1]   at j=0
        right = jnp.where(col == W - 1, prev, nxt)      # reflect: x[W-2] at j=W-1
        xw = a1 * x + a0 * left + a2 * right
        # H pass: banded (H,H) matmul; the 0.5 blend factor is folded into bh.
        x_res = x_filt + dot(bh, xw)

        out_ref[b] = x_res                    # resident (B,H,W) output block

        # ---- finalize: per-channel moment matching over (B,H,W) + clip ------
        @pl.when(b == B - 1)
        def _():
            res = out_ref[...]                # (B, H, W), pre-normalization
            sum_o = sx_ref[0, 0]
            mean_o = sum_o / n_elem
            var_o = (sxx_ref[0, 0] - sum_o * mean_o) / (n_elem - 1.0)
            sum_r = jnp.sum(res)
            mean_r = sum_r / n_elem
            var_r = (jnp.sum(res * res) - sum_r * mean_r) / (n_elem - 1.0)
            scale = jnp.sqrt(var_o) / jnp.sqrt(jnp.maximum(var_r, 1e-24))
            out_ref[...] = jnp.clip((res - mean_r) * scale + mean_o, 0.0, 1.0)

    return kernel


# ----------------------------------------------------------------------------
# Wrapper
# ----------------------------------------------------------------------------
def _vmem_limit_bytes():
    # Per-generation limit: ~85% of physical VMEM (v7x 64 MiB -> ~54 MiB,
    # v5e/v6e 128 MiB -> ~108 MiB); conservative fallback if query fails.
    try:
        cap = int(pltpu.get_tpu_info().vmem_capacity_bytes)
        return max(32 * 1024 * 1024, int(cap * 0.85))
    except Exception:
        return 48 * 1024 * 1024


def waves_forward(x, strength=1.0):
    """Pallas implementation of WavesModel.forward.  x: (B, C, H, W) float32."""
    x = x.astype(jnp.float32)
    B, C, H, W = x.shape
    threshold = 0.1 * strength

    a = _gaussian_taps_1d(3, 1.0)
    fwr, fwi = _dft_matrix(W)
    fhr, fhi = _dft_matrix(H)
    bh_half = (0.5 * _blur_matrix(H, a)).astype(np.float32)   # 0.5 blend folded

    consts = [jnp.asarray(c) for c in (fwr, fwi, fhr, fhi, bh_half)]
    kernel = _make_kernel(B, H, W, threshold, a)

    # Constants: whole-array VMEM residency (single copy, no per-step re-fetch,
    # no double buffering).
    const_spec = pl.BlockSpec(memory_space=pltpu.MemorySpace.VMEM)

    grid_spec = pltpu.PrefetchScalarGridSpec(
        num_scalar_prefetch=0,
        grid=(C, B),                                  # c slow/parallel, b fast/arbitrary
        in_specs=[
            # One (H, W) NCHW slab per step (B, C squeezed); no wrapper transpose.
            pl.BlockSpec((None, None, H, W), lambda c, b: (b, c, 0, 0)),
            const_spec, const_spec, const_spec, const_spec, const_spec,
        ],
        # Output block constant across b -> resident accumulator for the channel.
        out_specs=pl.BlockSpec((B, None, H, W), lambda c, b: (0, c, 0, 0)),
        scratch_shapes=[pltpu.VMEM((1, 1), jnp.float32),    # sum(x)   per channel
                        pltpu.VMEM((1, 1), jnp.float32)],   # sum(x^2) per channel
    )

    out = pl.pallas_call(
        kernel,
        out_shape=jax.ShapeDtypeStruct((B, C, H, W), jnp.float32),
        grid_spec=grid_spec,
        compiler_params=pltpu.CompilerParams(
            dimension_semantics=("parallel", "arbitrary"),
            vmem_limit_bytes=_vmem_limit_bytes(),
        ),
    )(x, *consts)
    return out


# ----------------------------------------------------------------------------
# Pure-JAX reference (same math, FFT via jnp.fft) for a sanity check.
# ----------------------------------------------------------------------------
def waves_reference(x, strength=1.0):
    x = x.astype(jnp.float32)
    B, C, H, W = x.shape
    thr = 0.1 * strength
    Yv = jnp.linspace(-1.0, 1.0, H)
    Xv = jnp.linspace(-1.0, 1.0, W)
    R = jnp.sqrt(Xv[None, :] ** 2 + Yv[:, None] ** 2)
    mask = (R > thr).astype(jnp.float32)

    xf = jnp.fft.fftshift(jnp.fft.fft2(x), axes=(-2, -1)) * mask
    x_filt = jnp.real(jnp.fft.ifft2(jnp.fft.ifftshift(xf, axes=(-2, -1))))

    gk = jnp.asarray(_gaussian_kernel_2d(3, 1.0))
    xpad = jnp.pad(x, ((0, 0), (0, 0), (1, 1), (1, 1)), mode='reflect')
    x_smooth = jnp.zeros_like(x)
    for di in range(3):
        for dj in range(3):
            x_smooth = x_smooth + gk[di, dj] * xpad[:, :, di:di + H, dj:dj + W]

    x_res = 0.5 * x_filt + 0.5 * x_smooth
    mo = jnp.mean(x, axis=(0, 2, 3), keepdims=True)
    mr = jnp.mean(x_res, axis=(0, 2, 3), keepdims=True)
    so = jnp.std(x, axis=(0, 2, 3), ddof=1, keepdims=True)
    sr = jnp.std(x_res, axis=(0, 2, 3), ddof=1, keepdims=True)
    out = (x_res - mr) * (so / sr) + mo
    return jnp.clip(out, 0.0, 1.0)


if __name__ == "__main__":
    key = jax.random.PRNGKey(0)
    x = jax.random.uniform(key, (2, 4, 16, 16), dtype=jnp.float32)  # image-like [0,1]

    out = jax.block_until_ready(waves_forward(x, strength=1.0))
    ref = jax.block_until_ready(waves_reference(x, strength=1.0))
    np.testing.assert_allclose(np.asarray(out), np.asarray(ref),
                               rtol=2e-3, atol=3e-3)

    print("KERNEL_OK")
</pallas_src>

<mosaic_0001>
module attributes {stable_mosaic.version = 11 : i64} {
  func.func @kernel(%arg0: i32, %arg1: i32, %arg2: memref<1x1x16x16xf32, #tpu.memory_space<vmem>>, %arg3: memref<16x16xf32, #tpu.memory_space<vmem>>, %arg4: memref<16x16xf32, #tpu.memory_space<vmem>>, %arg5: memref<16x16xf32, #tpu.memory_space<vmem>>, %arg6: memref<16x16xf32, #tpu.memory_space<vmem>>, %arg7: memref<16x16xf32, #tpu.memory_space<vmem>>, %arg8: memref<2x1x16x16xf32, #tpu.memory_space<vmem>>, %arg9: memref<1x1xf32, #tpu.memory_space<vmem>>, %arg10: memref<1x1xf32, #tpu.memory_space<vmem>>) attributes {dimension_semantics = [#tpu.dimension_semantics<parallel>, #tpu.dimension_semantics<arbitrary>], iteration_bounds = array<i64: 4, 2>, scalar_prefetch = 0 : i64, scratch_operands = 2 : i64, tpu.core_type = #tpu.core_type<tc>, window_params = [{transform_indices = @transform_0, window_bounds = array<i64: 1, 1, 16, 16>}, {pipeline_mode = #tpu.pipeline_mode<synchronous>, transform_indices = @transform_1, window_bounds = array<i64: 16, 16>}, {pipeline_mode = #tpu.pipeline_mode<synchronous>, transform_indices = @transform_2, window_bounds = array<i64: 16, 16>}, {pipeline_mode = #tpu.pipeline_mode<synchronous>, transform_indices = @transform_3, window_bounds = array<i64: 16, 16>}, {pipeline_mode = #tpu.pipeline_mode<synchronous>, transform_indices = @transform_4, window_bounds = array<i64: 16, 16>}, {pipeline_mode = #tpu.pipeline_mode<synchronous>, transform_indices = @transform_5, window_bounds = array<i64: 16, 16>}, {transform_indices = @transform_6, window_bounds = array<i64: 2, 1, 16, 16>}]} {
    %c0 = arith.constant 0 : index
    %c0_0 = arith.constant 0 : index
    %c0_1 = arith.constant 0 : index
    %c0_2 = arith.constant 0 : index
    %0 = vector.load %arg2[%c0, %c0_0, %c0_1, %c0_2] : memref<1x1x16x16xf32, #tpu.memory_space<vmem>>, vector<1x1x16x16xf32>
    %1 = vector.shape_cast %0 : vector<1x1x16x16xf32> to vector<16x16xf32>
    %c0_3 = arith.constant 0 : index
    %c0_4 = arith.constant 0 : index
    %2 = vector.load %arg3[%c0_3, %c0_4] : memref<16x16xf32, #tpu.memory_space<vmem>>, vector<16x16xf32>
    %c0_5 = arith.constant 0 : index
    %c0_6 = arith.constant 0 : index
    %3 = vector.load %arg4[%c0_5, %c0_6] : memref<16x16xf32, #tpu.memory_space<vmem>>, vector<16x16xf32>
    %c0_7 = arith.constant 0 : index
    %c0_8 = arith.constant 0 : index
    %4 = vector.load %arg5[%c0_7, %c0_8] : memref<16x16xf32, #tpu.memory_space<vmem>>, vector<16x16xf32>
    %c0_9 = arith.constant 0 : index
    %c0_10 = arith.constant 0 : index
    %5 = vector.load %arg6[%c0_9, %c0_10] : memref<16x16xf32, #tpu.memory_space<vmem>>, vector<16x16xf32>
    %c0_11 = arith.constant 0 : index
    %c0_12 = arith.constant 0 : index
    %6 = vector.load %arg7[%c0_11, %c0_12] : memref<16x16xf32, #tpu.memory_space<vmem>>, vector<16x16xf32>
    %c0_i32 = arith.constant 0 : i32
    %7 = arith.cmpi eq, %arg1, %c0_i32 : i32
    %8 = arith.extui %7 : i1 to i32
    %c0_i32_13 = arith.constant 0 : i32
    %9 = arith.cmpi ne, %8, %c0_i32_13 : i32
    scf.if %9 {
      %cst_73 = arith.constant 0.000000e+00 : f32
      %149 = vector.broadcast %cst_73 : f32 to vector<1x1xf32>
      %c0_74 = arith.constant 0 : index
      %c0_75 = arith.constant 0 : index
      %150 = vector.load %arg9[%c0_74, %c0_75] : memref<1x1xf32, #tpu.memory_space<vmem>>, vector<1x1xf32>
      tpu.vector_store %arg9[%c0_74, %c0_75], %149 {strides = array<i32>} : memref<1x1xf32, #tpu.memory_space<vmem>>, vector<1x1xf32>,
      %cst_76 = arith.constant 0.000000e+00 : f32
      %151 = vector.broadcast %cst_76 : f32 to vector<1x1xf32>
      %c0_77 = arith.constant 0 : index
      %c0_78 = arith.constant 0 : index
      %152 = vector.load %arg10[%c0_77, %c0_78] : memref<1x1xf32, #tpu.memory_space<vmem>>, vector<1x1xf32>
      tpu.vector_store %arg10[%c0_77, %c0_78], %151 {strides = array<i32>} : memref<1x1xf32, #tpu.memory_space<vmem>>, vector<1x1xf32>,
    } else {
    }
    %c0_14 = arith.constant 0 : index
    %c0_15 = arith.constant 0 : index
    %10 = vector.load %arg9[%c0_14, %c0_15] : memref<1x1xf32, #tpu.memory_space<vmem>>, vector<1x1xf32>
    %11 = vector.shape_cast %1 : vector<16x16xf32> to vector<1x16x16xf32>
    %cst = arith.constant dense<0.000000e+00> : vector<1xf32>
    %12 = vector.multi_reduction <add>, %11, %cst [1, 2] : vector<1x16x16xf32> to vector<1xf32>
    %13 = vector.shape_cast %12 : vector<1xf32> to vector<1x1x1xf32>
    %14 = vector.extract %13[0, 0, 0] : f32 from vector<1x1x1xf32>
    %15 = vector.broadcast %14 : f32 to vector<1x1xf32>
    %16 = arith.addf %10, %15 : vector<1x1xf32>
    %c0_16 = arith.constant 0 : index
    %c0_17 = arith.constant 0 : index
    %17 = vector.load %arg9[%c0_16, %c0_17] : memref<1x1xf32, #tpu.memory_space<vmem>>, vector<1x1xf32>
    tpu.vector_store %arg9[%c0_16, %c0_17], %16 {strides = array<i32>} : memref<1x1xf32, #tpu.memory_space<vmem>>, vector<1x1xf32>,
    %c0_18 = arith.constant 0 : index
    %c0_19 = arith.constant 0 : index
    %18 = vector.load %arg10[%c0_18, %c0_19] : memref<1x1xf32, #tpu.memory_space<vmem>>, vector<1x1xf32>
    %19 = arith.mulf %1, %1 : vector<16x16xf32>
    %20 = vector.shape_cast %19 : vector<16x16xf32> to vector<1x16x16xf32>
    %cst_20 = arith.constant dense<0.000000e+00> : vector<1xf32>
    %21 = vector.multi_reduction <add>, %20, %cst_20 [1, 2] : vector<1x16x16xf32> to vector<1xf32>
    %22 = vector.shape_cast %21 : vector<1xf32> to vector<1x1x1xf32>
    %23 = vector.extract %22[0, 0, 0] : f32 from vector<1x1x1xf32>
    %24 = vector.broadcast %23 : f32 to vector<1x1xf32>
    %25 = arith.addf %18, %24 : vector<1x1xf32>
    %c0_21 = arith.constant 0 : index
    %c0_22 = arith.constant 0 : index
    %26 = vector.load %arg10[%c0_21, %c0_22] : memref<1x1xf32, #tpu.memory_space<vmem>>, vector<1x1xf32>
    tpu.vector_store %arg10[%c0_21, %c0_22], %25 {strides = array<i32>} : memref<1x1xf32, #tpu.memory_space<vmem>>, vector<1x1xf32>,
    %27 = tpu.iota {dimensions = array<i32: 0>} : vector<16x16xi32>
    %28 = tpu.iota {dimensions = array<i32: 1>} : vector<16x16xi32>
    %c8_i32 = arith.constant 8 : i32
    %29 = vector.broadcast %c8_i32 : i32 to vector<16x16xi32>
    %30 = arith.addi %27, %29 : vector<16x16xi32>
    %c16_i32 = arith.constant 16 : i32
    %c0_i32_23 = arith.constant 0 : i32
    %31 = arith.cmpi eq, %c16_i32, %c0_i32_23 : i32
    %c1_i32 = arith.constant 1 : i32
    %32 = arith.select %31, %c1_i32, %c16_i32 : i32
    %33 = vector.broadcast %32 : i32 to vector<16x16xi32>
    %34 = arith.remsi %30, %33 : vector<16x16xi32>
    %c0_i32_24 = arith.constant 0 : i32
    %35 = vector.broadcast %c0_i32_24 : i32 to vector<16x16xi32>
    %36 = arith.cmpi ne, %34, %35 : vector<16x16xi32>
    %c0_i32_25 = arith.constant 0 : i32
    %37 = vector.broadcast %c0_i32_25 : i32 to vector<16x16xi32>
    %38 = arith.cmpi slt, %34, %37 : vector<16x16xi32>
    %c0_i32_26 = arith.constant 0 : i32
    %39 = arith.cmpi slt, %32, %c0_i32_26 : i32
    %40 = vector.broadcast %39 : i1 to vector<16x16xi1>
    %41 = vector.broadcast %40 : vector<16x16xi1> to vector<16x16xi1>
    %42 = arith.xori %38, %41 : vector<16x16xi1>
    %43 = arith.andi %42, %36 : vector<16x16xi1>
    %44 = vector.broadcast %32 : i32 to vector<16x16xi32>
    %45 = arith.addi %34, %44 : vector<16x16xi32>
    %46 = arith.select %43, %45, %34 : vector<16x16xi1>, vector<16x16xi32>
    %c8_i32_27 = arith.constant 8 : i32
    %47 = vector.broadcast %c8_i32_27 : i32 to vector<16x16xi32>
    %48 = arith.addi %28, %47 : vector<16x16xi32>
    %c16_i32_28 = arith.constant 16 : i32
    %c0_i32_29 = arith.constant 0 : i32
    %49 = arith.cmpi eq, %c16_i32_28, %c0_i32_29 : i32
    %c1_i32_30 = arith.constant 1 : i32
    %50 = arith.select %49, %c1_i32_30, %c16_i32_28 : i32
    %51 = vector.broadcast %50 : i32 to vector<16x16xi32>
    %52 = arith.remsi %48, %51 : vector<16x16xi32>
    %c0_i32_31 = arith.constant 0 : i32
    %53 = vector.broadcast %c0_i32_31 : i32 to vector<16x16xi32>
    %54 = arith.cmpi ne, %52, %53 : vector<16x16xi32>
    %c0_i32_32 = arith.constant 0 : i32
    %55 = vector.broadcast %c0_i32_32 : i32 to vector<16x16xi32>
    %56 = arith.cmpi slt, %52, %55 : vector<16x16xi32>
    %c0_i32_33 = arith.constant 0 : i32
    %57 = arith.cmpi slt, %50, %c0_i32_33 : i32
    %58 = vector.broadcast %57 : i1 to vector<16x16xi1>
    %59 = vector.broadcast %58 : vector<16x16xi1> to vector<16x16xi1>
    %60 = arith.xori %56, %59 : vector<16x16xi1>
    %61 = arith.andi %60, %54 : vector<16x16xi1>
    %62 = vector.broadcast %50 : i32 to vector<16x16xi32>
    %63 = arith.addi %52, %62 : vector<16x16xi32>
    %64 = arith.select %61, %63, %52 : vector<16x16xi1>, vector<16x16xi32>
    %65 = arith.sitofp %46 : vector<16x16xi32> to vector<16x16xf32>
    %cst_34 = arith.constant 0.13333334 : f32
    %66 = vector.broadcast %cst_34 : f32 to vector<16x16xf32>
    %67 = arith.mulf %66, %65 : vector<16x16xf32>
    %cst_35 = arith.constant -1.000000e+00 : f32
    %68 = vector.broadcast %cst_35 : f32 to vector<16x16xf32>
    %69 = arith.addf %68, %67 : vector<16x16xf32>
    %70 = arith.sitofp %64 : vector<16x16xi32> to vector<16x16xf32>
    %cst_36 = arith.constant 0.13333334 : f32
    %71 = vector.broadcast %cst_36 : f32 to vector<16x16xf32>
    %72 = arith.mulf %71, %70 : vector<16x16xf32>
    %cst_37 = arith.constant -1.000000e+00 : f32
    %73 = vector.broadcast %cst_37 : f32 to vector<16x16xf32>
    %74 = arith.addf %73, %72 : vector<16x16xf32>
    %75 = arith.mulf %74, %74 : vector<16x16xf32>
    %76 = arith.mulf %69, %69 : vector<16x16xf32>
    %77 = arith.addf %75, %76 : vector<16x16xf32>
    %cst_38 = arith.constant 0.00999999977 : f32
    %78 = vector.broadcast %cst_38 : f32 to vector<16x16xf32>
    %79 = arith.cmpf ogt, %77, %78 : vector<16x16xf32>
    %cst_39 = arith.constant 0.001953125 : f32
    %cst_40 = arith.constant 0.000000e+00 : f32
    %80 = vector.broadcast %cst_39 : f32 to vector<16x16xf32>
    %81 = vector.broadcast %cst_40 : f32 to vector<16x16xf32>
    %82 = arith.select %79, %80, %81 : vector<16x16xi1>, vector<16x16xf32>
    %cst_41 = arith.constant dense<0.000000e+00> : vector<16x16xf32>
    %83 = tpu.matmul %1, %2, %cst_41 {dimension_numbers = #tpu.dot_dimension_numbers<[1], [0], [0], [1], [0, 0, 1, 1], [], []>} : vector<16x16xf32>, vector<16x16xf32>, vector<16x16xf32> -> vector<16x16xf32>
    %cst_42 = arith.constant dense<0.000000e+00> : vector<16x16xf32>
    %84 = tpu.matmul %1, %3, %cst_42 {dimension_numbers = #tpu.dot_dimension_numbers<[1], [0], [0], [1], [0, 0, 1, 1], [], []>} : vector<16x16xf32>, vector<16x16xf32>, vector<16x16xf32> -> vector<16x16xf32>
    %cst_43 = arith.constant dense<0.000000e+00> : vector<16x16xf32>
    %85 = tpu.matmul %4, %83, %cst_43 {dimension_numbers = #tpu.dot_dimension_numbers<[1], [0], [0], [1], [0, 0, 1, 1], [], []>} : vector<16x16xf32>, vector<16x16xf32>, vector<16x16xf32> -> vector<16x16xf32>
    %cst_44 = arith.constant dense<0.000000e+00> : vector<16x16xf32>
    %86 = tpu.matmul %5, %84, %cst_44 {dimension_numbers = #tpu.dot_dimension_numbers<[1], [0], [0], [1], [0, 0, 1, 1], [], []>} : vector<16x16xf32>, vector<16x16xf32>, vector<16x16xf32> -> vector<16x16xf32>
    %87 = arith.subf %85, %86 : vector<16x16xf32>
    %88 = arith.mulf %87, %82 : vector<16x16xf32>
    %cst_45 = arith.constant dense<0.000000e+00> : vector<16x16xf32>
    %89 = tpu.matmul %4, %84, %cst_45 {dimension_numbers = #tpu.dot_dimension_numbers<[1], [0], [0], [1], [0, 0, 1, 1], [], []>} : vector<16x16xf32>, vector<16x16xf32>, vector<16x16xf32> -> vector<16x16xf32>
    %cst_46 = arith.constant dense<0.000000e+00> : vector<16x16xf32>
    %90 = tpu.matmul %5, %83, %cst_46 {dimension_numbers = #tpu.dot_dimension_numbers<[1], [0], [0], [1], [0, 0, 1, 1], [], []>} : vector<16x16xf32>, vector<16x16xf32>, vector<16x16xf32> -> vector<16x16xf32>
    %91 = arith.addf %89, %90 : vector<16x16xf32>
    %92 = arith.mulf %91, %82 : vector<16x16xf32>
    %cst_47 = arith.constant dense<0.000000e+00> : vector<16x16xf32>
    %93 = tpu.matmul %4, %88, %cst_47 {dimension_numbers = #tpu.dot_dimension_numbers<[1], [0], [0], [1], [0, 0, 1, 1], [], []>} : vector<16x16xf32>, vector<16x16xf32>, vector<16x16xf32> -> vector<16x16xf32>
    %cst_48 = arith.constant dense<0.000000e+00> : vector<16x16xf32>
    %94 = tpu.matmul %5, %92, %cst_48 {dimension_numbers = #tpu.dot_dimension_numbers<[1], [0], [0], [1], [0, 0, 1, 1], [], []>} : vector<16x16xf32>, vector<16x16xf32>, vector<16x16xf32> -> vector<16x16xf32>
    %95 = arith.addf %93, %94 : vector<16x16xf32>
    %cst_49 = arith.constant dense<0.000000e+00> : vector<16x16xf32>
    %96 = tpu.matmul %4, %92, %cst_49 {dimension_numbers = #tpu.dot_dimension_numbers<[1], [0], [0], [1], [0, 0, 1, 1], [], []>} : vector<16x16xf32>, vector<16x16xf32>, vector<16x16xf32> -> vector<16x16xf32>
    %cst_50 = arith.constant dense<0.000000e+00> : vector<16x16xf32>
    %97 = tpu.matmul %5, %88, %cst_50 {dimension_numbers = #tpu.dot_dimension_numbers<[1], [0], [0], [1], [0, 0, 1, 1], [], []>} : vector<16x16xf32>, vector<16x16xf32>, vector<16x16xf32> -> vector<16x16xf32>
    %98 = arith.subf %96, %97 : vector<16x16xf32>
    %cst_51 = arith.constant dense<0.000000e+00> : vector<16x16xf32>
    %99 = tpu.matmul %95, %2, %cst_51 {dimension_numbers = #tpu.dot_dimension_numbers<[1], [0], [0], [1], [0, 0, 1, 1], [], []>} : vector<16x16xf32>, vector<16x16xf32>, vector<16x16xf32> -> vector<16x16xf32>
    %cst_52 = arith.constant dense<0.000000e+00> : vector<16x16xf32>
    %100 = tpu.matmul %98, %3, %cst_52 {dimension_numbers = #tpu.dot_dimension_numbers<[1], [0], [0], [1], [0, 0, 1, 1], [], []>} : vector<16x16xf32>, vector<16x16xf32>, vector<16x16xf32> -> vector<16x16xf32>
    %101 = arith.addf %99, %100 : vector<16x16xf32>
    %c1_i32_53 = arith.constant 1 : i32
    %102 = tpu.dynamic_rotate %1 by %c1_i32_53 dim 1 : vector<16x16xf32>, i32 -> vector<16x16xf32>
    %c15_i32 = arith.constant 15 : i32
    %103 = tpu.dynamic_rotate %1 by %c15_i32 dim 1 : vector<16x16xf32>, i32 -> vector<16x16xf32>
    %c1_i32_54 = arith.constant 1 : i32
    %104 = tpu.dynamic_rotate %28 by %c1_i32_54 dim 1 : vector<16x16xi32>, i32 -> vector<16x16xi32>
    %c15_i32_55 = arith.constant 15 : i32
    %105 = vector.broadcast %c15_i32_55 : i32 to vector<16x16xi32>
    %106 = arith.addi %28, %105 : vector<16x16xi32>
    %c16_i32_56 = arith.constant 16 : i32
    %c0_i32_57 = arith.constant 0 : i32
    %107 = arith.cmpi eq, %c16_i32_56, %c0_i32_57 : i32
    %c1_i32_58 = arith.constant 1 : i32
    %108 = arith.select %107, %c1_i32_58, %c16_i32_56 : i32
    %109 = vector.broadcast %108 : i32 to vector<16x16xi32>
    %110 = arith.remsi %106, %109 : vector<16x16xi32>
    %c0_i32_59 = arith.constant 0 : i32
    %111 = vector.broadcast %c0_i32_59 : i32 to vector<16x16xi32>
    %112 = arith.cmpi ne, %110, %111 : vector<16x16xi32>
    %c0_i32_60 = arith.constant 0 : i32
    %113 = vector.broadcast %c0_i32_60 : i32 to vector<16x16xi32>
    %114 = arith.cmpi slt, %110, %113 : vector<16x16xi32>
    %c0_i32_61 = arith.constant 0 : i32
    %115 = arith.cmpi slt, %108, %c0_i32_61 : i32
    %116 = vector.broadcast %115 : i1 to vector<16x16xi1>
    %117 = vector.broadcast %116 : vector<16x16xi1> to vector<16x16xi1>
    %118 = arith.xori %114, %117 : vector<16x16xi1>
    %119 = arith.andi %118, %112 : vector<16x16xi1>
    %120 = vector.broadcast %108 : i32 to vector<16x16xi32>
    %121 = arith.addi %110, %120 : vector<16x16xi32>
    %122 = arith.select %119, %121, %110 : vector<16x16xi1>, vector<16x16xi32>
    %123 = arith.cmpi eq, %104, %122 : vector<16x16xi32>
    %124 = arith.select %123, %102, %103 : vector<16x16xi1>, vector<16x16xf32>
    %125 = arith.select %123, %103, %102 : vector<16x16xi1>, vector<16x16xf32>
    %c0_i32_62 = arith.constant 0 : i32
    %126 = vector.broadcast %c0_i32_62 : i32 to vector<16x16xi32>
    %127 = arith.cmpi eq, %28, %126 : vector<16x16xi32>
    %128 = arith.select %127, %125, %124 : vector<16x16xi1>, vector<16x16xf32>
    %c15_i32_63 = arith.constant 15 : i32
    %129 = vector.broadcast %c15_i32_63 : i32 to vector<16x16xi32>
    %130 = arith.cmpi eq, %28, %129 : vector<16x16xi32>
    %131 = arith.select %130, %124, %125 : vector<16x16xi1>, vector<16x16xf32>
    %cst_64 = arith.constant 0.543288052 : f32
    %132 = vector.broadcast %cst_64 : f32 to vector<16x16xf32>
    %133 = arith.mulf %132, %1 : vector<16x16xf32>
    %cst_65 = arith.constant 0.0833159163 : f32
    %134 = vector.broadcast %cst_65 : f32 to vector<16x16xf32>
    %135 = arith.mulf %134, %128 : vector<16x16xf32>
    %136 = arith.addf %133, %135 : vector<16x16xf32>
    %cst_66 = arith.constant 0.373396039 : f32
    %137 = vector.broadcast %cst_66 : f32 to vector<16x16xf32>
    %138 = arith.mulf %137, %131 : vector<16x16xf32>
    %139 = arith.addf %136, %138 : vector<16x16xf32>
    %cst_67 = arith.constant dense<0.000000e+00> : vector<16x16xf32>
    %140 = tpu.matmul %6, %139, %cst_67 {dimension_numbers = #tpu.dot_dimension_numbers<[1], [0], [0], [1], [0, 0, 1, 1], [], []>} : vector<16x16xf32>, vector<16x16xf32>, vector<16x16xf32> -> vector<16x16xf32>
    %141 = arith.addf %101, %140 : vector<16x16xf32>
    %142 = arith.index_cast %arg1 : i32 to index
    %c0_68 = arith.constant 0 : index
    %c0_69 = arith.constant 0 : index
    %c0_70 = arith.constant 0 : index
    %143 = vector.load %arg8[%142, %c0_68, %c0_69, %c0_70] : memref<2x1x16x16xf32, #tpu.memory_space<vmem>>, vector<1x1x16x16xf32>
    %144 = vector.shape_cast %143 : vector<1x1x16x16xf32> to vector<16x16xf32>
    %145 = vector.shape_cast %141 : vector<16x16xf32> to vector<1x1x16x16xf32>
    tpu.vector_store %arg8[%142, %c0_68, %c0_69, %c0_70], %145 {strides = array<i32>} : memref<2x1x16x16xf32, #tpu.memory_space<vmem>>, vector<1x1x16x16xf32>,
    %c1_i32_71 = arith.constant 1 : i32
    %146 = arith.cmpi eq, %arg1, %c1_i32_71 : i32
    %147 = arith.extui %146 : i1 to i32
    %c0_i32_72 = arith.constant 0 : i32
    %148 = arith.cmpi ne, %147, %c0_i32_72 : i32
    scf.if %148 {
      %c0_73 = arith.constant 0 : index
      %c0_74 = arith.constant 0 : index
      %c0_75 = arith.constant 0 : index
      %c0_76 = arith.constant 0 : index
      %149 = vector.load %arg8[%c0_73, %c0_74, %c0_75, %c0_76] : memref<2x1x16x16xf32, #tpu.memory_space<vmem>>, vector<2x1x16x16xf32>
      %150 = vector.shape_cast %149 : vector<2x1x16x16xf32> to vector<2x16x16xf32>
      %c0_77 = arith.constant 0 : index
      %c0_78 = arith.constant 0 : index
      %151 = vector.load %arg9[%c0_77, %c0_78] : memref<1x1xf32, #tpu.memory_space<vmem>>, vector<1x1xf32>
      %152 = vector.extract %151[0, 0] : f32 from vector<1x1xf32>
      %cst_79 = arith.constant 5.120000e+02 : f32
      %153 = arith.divf %152, %cst_79 : f32
      %c0_80 = arith.constant 0 : index
      %c0_81 = arith.constant 0 : index
      %154 = vector.load %arg10[%c0_80, %c0_81] : memref<1x1xf32, #tpu.memory_space<vmem>>, vector<1x1xf32>
      %155 = vector.extract %154[0, 0] : f32 from vector<1x1xf32>
      %156 = arith.mulf %152, %153 : f32
      %157 = arith.subf %155, %156 : f32
      %cst_82 = arith.constant 5.110000e+02 : f32
      %158 = arith.divf %157, %cst_82 : f32
      %159 = vector.shape_cast %150 : vector<2x16x16xf32> to vector<1x2x16x16xf32>
      %cst_83 = arith.constant dense<0.000000e+00> : vector<1xf32>
      %160 = vector.multi_reduction <add>, %159, %cst_83 [1, 2, 3] : vector<1x2x16x16xf32> to vector<1xf32>
      %161 = vector.shape_cast %160 : vector<1xf32> to vector<1x1x1x1xf32>
      %162 = vector.extract %161[0, 0, 0, 0] : f32 from vector<1x1x1x1xf32>
      %cst_84 = arith.constant 5.120000e+02 : f32
      %163 = arith.divf %162, %cst_84 : f32
      %164 = arith.mulf %150, %150 : vector<2x16x16xf32>
      %165 = vector.shape_cast %164 : vector<2x16x16xf32> to vector<1x2x16x16xf32>
      %cst_85 = arith.constant dense<0.000000e+00> : vector<1xf32>
      %166 = vector.multi_reduction <add>, %165, %cst_85 [1, 2, 3] : vector<1x2x16x16xf32> to vector<1xf32>
      %167 = vector.shape_cast %166 : vector<1xf32> to vector<1x1x1x1xf32>
      %168 = vector.extract %167[0, 0, 0, 0] : f32 from vector<1x1x1x1xf32>
      %169 = arith.mulf %162, %163 : f32
      %170 = arith.subf %168, %169 : f32
      %cst_86 = arith.constant 5.110000e+02 : f32
      %171 = arith.divf %170, %cst_86 : f32
      %172 = math.sqrt %158 : f32
      %cst_87 = arith.constant 1.000000e-24 : f32
      %173 = arith.maximumf %171, %cst_87 : f32
      %174 = math.sqrt %173 : f32
      %175 = arith.divf %172, %174 : f32
      %176 = vector.broadcast %163 : f32 to vector<2x16x16xf32>
      %177 = arith.subf %150, %176 : vector<2x16x16xf32>
      %178 = vector.broadcast %175 : f32 to vector<2x16x16xf32>
      %179 = arith.mulf %177, %178 : vector<2x16x16xf32>
      %180 = vector.broadcast %153 : f32 to vector<2x16x16xf32>
      %181 = arith.addf %179, %180 : vector<2x16x16xf32>
      %cst_88 = arith.constant 0.000000e+00 : f32
      %cst_89 = arith.constant 1.000000e+00 : f32
      %182 = vector.broadcast %cst_88 : f32 to vector<2x16x16xf32>
      %183 = arith.maximumf %182, %181 : vector<2x16x16xf32>
      %184 = vector.broadcast %cst_89 : f32 to vector<2x16x16xf32>
      %185 = arith.minimumf %184, %183 : vector<2x16x16xf32>
      %c0_90 = arith.constant 0 : index
      %c0_91 = arith.constant 0 : index
      %c0_92 = arith.constant 0 : index
      %c0_93 = arith.constant 0 : index
      %186 = vector.load %arg8[%c0_90, %c0_91, %c0_92, %c0_93] : memref<2x1x16x16xf32, #tpu.memory_space<vmem>>, vector<2x1x16x16xf32>
      %187 = vector.shape_cast %186 : vector<2x1x16x16xf32> to vector<2x16x16xf32>
      %188 = vector.shape_cast %185 : vector<2x16x16xf32> to vector<2x1x16x16xf32>
      tpu.vector_store %arg8[%c0_90, %c0_91, %c0_92, %c0_93], %188 {strides = array<i32>} : memref<2x1x16x16xf32, #tpu.memory_space<vmem>>, vector<2x1x16x16xf32>,
    } else {
    }
    return
  }
  func.func @transform_0(%arg0: i32, %arg1: i32) -> (i32, i32, i32, i32) {
    %c0_i32 = arith.constant 0 : i32
    %c0_i32_0 = arith.constant 0 : i32
    %c0_i32_1 = arith.constant 0 : i32
    return %arg1, %arg0, %c0_i32, %c0_i32_0 : i32, i32, i32, i32
  }
  func.func @transform_1(%arg0: i32, %arg1: i32) -> (i32, i32) {
    %c0_i32 = arith.constant 0 : i32
    %c0_i32_0 = arith.constant 0 : i32
    %c0_i32_1 = arith.constant 0 : i32
    return %c0_i32, %c0_i32_0 : i32, i32
  }
  func.func @transform_2(%arg0: i32, %arg1: i32) -> (i32, i32) {
    %c0_i32 = arith.constant 0 : i32
    %c0_i32_0 = arith.constant 0 : i32
    %c0_i32_1 = arith.constant 0 : i32
    return %c0_i32, %c0_i32_0 : i32, i32
  }
  func.func @transform_3(%arg0: i32, %arg1: i32) -> (i32, i32) {
    %c0_i32 = arith.constant 0 : i32
    %c0_i32_0 = arith.constant 0 : i32
    %c0_i32_1 = arith.constant 0 : i32
    return %c0_i32, %c0_i32_0 : i32, i32
  }
  func.func @transform_4(%arg0: i32, %arg1: i32) -> (i32, i32) {
    %c0_i32 = arith.constant 0 : i32
    %c0_i32_0 = arith.constant 0 : i32
    %c0_i32_1 = arith.constant 0 : i32
    return %c0_i32, %c0_i32_0 : i32, i32
  }
  func.func @transform_5(%arg0: i32, %arg1: i32) -> (i32, i32) {
    %c0_i32 = arith.constant 0 : i32
    %c0_i32_0 = arith.constant 0 : i32
    %c0_i32_1 = arith.constant 0 : i32
    return %c0_i32, %c0_i32_0 : i32, i32
  }
  func.func @transform_6(%arg0: i32, %arg1: i32) -> (i32, i32, i32, i32) {
    %c0_i32 = arith.constant 0 : i32
    %c0_i32_0 = arith.constant 0 : i32
    %c0_i32_1 = arith.constant 0 : i32
    %c0_i32_2 = arith.constant 0 : i32
    return %c0_i32, %arg0, %c0_i32_0, %c0_i32_1 : i32, i32, i32, i32
  }
}

</mosaic_0001>

<llo_original>
// kernel: tpu_custom_call.1
$region0: #{tpu_custom_call.1}
  #allocation0 [shape = 'u32[]', space=smem, size = 0x4, offset = 0x4, fixed_abs, tag = 'smem constant byte address 0x4 - core index']
  #allocation1 [shape = 'u32[72,128]{1,0:T(1,128)}', space=vmem, size = 0x9000, scoped, tag = 'internal scratch']
  #allocation2 [shape = 'f32[1,1]{1,0:T(1,128)}', space=vmem, size = 0x200, scoped, tag = 'scratch operand']
  #allocation3 [shape = 'f32[1,1]{1,0:T(1,128)}', space=vmem, size = 0x200, scoped, tag = 'scratch operand']
  #allocation16 [shape = 's32[]', space=sflag, size = 0x4, offset = 0, fixed_abs, tag = 'sflag constant byte address 0x0 - dummy sync flag']
  %s0 = inlined_call_operand.hbm [shape: f32[2,4,16,16], index: 0, kind: input, shape index: {}]
  %s1 = inlined_call_operand.hbm [shape: f32[16,16], index: 1, kind: input, shape index: {}]
  %s2 = inlined_call_operand.hbm [shape: f32[16,16], index: 2, kind: input, shape index: {}]
  %s3 = inlined_call_operand.hbm [shape: f32[16,16], index: 3, kind: input, shape index: {}]
  %s4 = inlined_call_operand.hbm [shape: f32[16,16], index: 4, kind: input, shape index: {}]
  %s5 = inlined_call_operand.hbm [shape: f32[16,16], index: 5, kind: input, shape index: {}]
  %s6 = inlined_call_operand.hbm [shape: f32[2,4,16,16], index: 6, kind: output, shape index: {}]
  %s7 = sld [smem:[#allocation0]]
  $region89: #{tpu_custom_call.1} parent=0
    _
  %s9 = ssub.s32 1, %s7
  %s10 = scalar_select 0, %s9, %s7
  $region1: #{tpu_custom_call.1} parent=0
    #allocation4 [shape = 'u8[16384]{0}', space=vmem, size = 0x4000, scoped, tag = 'input window, operand 0']
    #allocation5 [shape = 's32[2]{0}', space=sflag, size = 0x8, scoped, tag = 'scoped memory for tpu_custom_call.1']
    #allocation6 [shape = 's32[2]{0}', space=sflag, size = 0x8, scoped, tag = 'scoped memory for tpu_custom_call.1']
    #allocation7 [shape = 'u8[8192]{0}', space=vmem, size = 0x2000, scoped, tag = 'input window, operand 1, single buffered']
    #allocation8 [shape = 's32[1]{0}', space=sflag, size = 0x4, scoped, tag = 'scoped memory for tpu_custom_call.1']
    #allocation9 [shape = 'u8[8192]{0}', space=vmem, size = 0x2000, scoped, tag = 'input window, operand 2, single buffered']
    #allocation10 [shape = 'u8[8192]{0}', space=vmem, size = 0x2000, scoped, tag = 'input window, operand 3, single buffered']
    #allocation11 [shape = 's32[1]{0}', space=sflag, size = 0x4, scoped, tag = 'scoped memory for tpu_custom_call.1']
    #allocation12 [shape = 'u8[8192]{0}', space=vmem, size = 0x2000, scoped, tag = 'input window, operand 4, single buffered']
    #allocation13 [shape = 'u8[8192]{0}', space=vmem, size = 0x2000, scoped, tag = 'input window, operand 5, single buffered']
    #allocation14 [shape = 's32[1]{0}', space=sflag, size = 0x4, scoped, tag = 'scoped memory for tpu_custom_call.1']
    #allocation15 [shape = 'u8[32768]{0}', space=vmem, size = 0x8000, scoped, tag = 'output window, operand 0']
    %11 = vsyncpa [#allocation5], 0
    %s12 = scalar_lea.sflag [#allocation5], 1
    %13 = vsyncpa %s12, 0
    %14 = vsyncpa [#allocation8], 0
    %15 = vsyncpa [#allocation11], 0
    %16 = vsyncpa [#allocation14], 0
    %17 = vsyncpa [#allocation6], 0
    %s18 = scalar_lea.sflag [#allocation6], 1
    %19 = vsyncpa %s18, 0
    loop: start=0, step=1, limit=10
    $region2: #{tpu_custom_call.1} parent=1 // loop_pre_header
      _
    $region3: #{tpu_custom_call.1} parent=1 // loop_header
      %s21 = sphi 0, %s25
      %p22 = scmp.ge.s32.totalorder %s21, 10
      %s28 = sphi 0, %s40
      %s29 = sphi 0, %s36
      %s30 = sphi 0, %s28
      %s31 = sphi 0, %s29
      %s32 = sphi 0, %s30
      %s33 = sphi 0, %s31
      %s45 = sphi 0, %s47
      %s48 = sphi 0, %s45
      %s49 = sphi 0, %s48
      %s65 = sphi 0, %s49
      %s69 = sphi 0, %s69
      %s71 = sphi 0, %s69
      %s72 = sphi 0, %s71
      %s86 = sphi 0, %s72
      %s90 = sphi 0, %s90
      %s92 = sphi 0, %s90
      %s93 = sphi 0, %s92
      %s107 = sphi 0, %s93
      %s111 = sphi 0, %s111
      %s113 = sphi 0, %s111
      %s114 = sphi 0, %s113
      %s128 = sphi 0, %s114
      %s132 = sphi 0, %s132
      %s134 = sphi 0, %s132
      %s135 = sphi 0, %s134
      %s149 = sphi 0, %s135
      %s153 = sphi 0, %s153
      %s155 = sphi 0, %s153
      %s156 = sphi 0, %s155
      %s170 = sphi 0, %s156
      %s176 = sphi 0, %s178
      %s179 = sphi 0, %s176
      %s180 = sphi 0, %s179
      %s196 = sphi 0, %s180
    $region4: #{tpu_custom_call.1} parent=1 // loop_header_branch
      %24 = sbr.rel (%p22) target = $region8
    $region5: #{tpu_custom_call.1} parent=1 // loop_body
      %s26 = ssub.s32 %s21, 1
      %s27 = ssub.s32 %s21, 2
      %s34 = sadd.s32 1, %s29
      %p35 = scmp.ge.s32.totalorder %s34, 2
      %s36 = scalar_select %p35, 0, %s34
      %s37 = sadd.s32 1, %s28
      %s38 = scalar_select %p35, %s37, %s28
      %p39 = scmp.ge.s32.totalorder %s38, 4
      %s40 = scalar_select %p39, 0, %s38
      %s41 = ssub.s32 %s29, %s36
      %s42 = ssub.s32 %s28, %s40
      %s43 = sor.u32 %s41, %s42
      %p44 = scmp.eq.s32.totalorder %s43, 0
      %s46 = sadd.s32 %s45, 1
      %s47 = scalar_select %p44, %s45, %s46
      %p50 = pneg %p44
      %p51 = scmp.eq.s32.totalorder %s21, 7
      %p52 = por %p50, %p51
      %p53 = scmp.ne.s32.totalorder %s45, %s48
      %p54 = scmp.eq.s32.totalorder %s21, 0
      %p55 = por %p53, %p54
      %p56 = scmp.ne.s32.totalorder %s45, %s48
      %p57 = scmp.eq.s32.totalorder %s26, 7
      %p58 = por %p56, %p57
      %p59 = scmp.ne.s32.totalorder %s48, %s49
      %p60 = scmp.eq.s32.totalorder %s26, 0
      %p61 = por %p59, %p60
      %p62 = scmp.ne.s32.totalorder %s48, %s49
      %p63 = scmp.eq.s32.totalorder %s27, 7
      %p64 = por %p62, %p63
      %p66 = scmp.ne.s32.totalorder %s49, %s65
      %p67 = scmp.eq.s32.totalorder %s27, 0
      %p68 = por %p66, %p67
      %s70 = sadd.s32 %s69, 1
      %p73 = scmp.eq.s32.totalorder %s21, 7
      %p74 = scmp.ne.s32.totalorder %s69, %s71
      %p75 = scmp.eq.s32.totalorder %s21, 0
      %p76 = por %p74, %p75
      %p77 = scmp.ne.s32.totalorder %s69, %s71
      %p78 = scmp.eq.s32.totalorder %s26, 7
      %p79 = por %p77, %p78
      %p80 = scmp.ne.s32.totalorder %s71, %s72
      %p81 = scmp.eq.s32.totalorder %s26, 0
      %p82 = por %p80, %p81
      %p83 = scmp.ne.s32.totalorder %s71, %s72
      %p84 = scmp.eq.s32.totalorder %s27, 7
      %p85 = por %p83, %p84
      %p87 = scmp.ne.s32.totalorder %s72, %s86
      %p88 = scmp.eq.s32.totalorder %s27, 0
      %p89 = por %p87, %p88
      %s91 = sadd.s32 %s90, 1
      %p94 = scmp.eq.s32.totalorder %s21, 7
      %p95 = scmp.ne.s32.totalorder %s90, %s92
      %p96 = scmp.eq.s32.totalorder %s21, 0
      %p97 = por %p95, %p96
      %p98 = scmp.ne.s32.totalorder %s90, %s92
      %p99 = scmp.eq.s32.totalorder %s26, 7
      %p100 = por %p98, %p99
      %p101 = scmp.ne.s32.totalorder %s92, %s93
      %p102 = scmp.eq.s32.totalorder %s26, 0
      %p103 = por %p101, %p102
      %p104 = scmp.ne.s32.totalorder %s92, %s93
      %p105 = scmp.eq.s32.totalorder %s27, 7
      %p106 = por %p104, %p105
      %p108 = scmp.ne.s32.totalorder %s93, %s107
      %p109 = scmp.eq.s32.totalorder %s27, 0
      %p110 = por %p108, %p109
      %s112 = sadd.s32 %s111, 1
      %p115 = scmp.eq.s32.totalorder %s21, 7
      %p116 = scmp.ne.s32.totalorder %s111, %s113
      %p117 = scmp.eq.s32.totalorder %s21, 0
      %p118 = por %p116, %p117
      %p119 = scmp.ne.s32.totalorder %s111, %s113
      %p120 = scmp.eq.s32.totalorder %s26, 7
      %p121 = por %p119, %p120
      %p122 = scmp.ne.s32.totalorder %s113, %s114
      %p123 = scmp.eq.s32.totalorder %s26, 0
      %p124 = por %p122, %p123
      %p125 = scmp.ne.s32.totalorder %s113, %s114
      %p126 = scmp.eq.s32.totalorder %s27, 7
      %p127 = por %p125, %p126
      %p129 = scmp.ne.s32.totalorder %s114, %s128
      %p130 = scmp.eq.s32.totalorder %s27, 0
      %p131 = por %p129, %p130
      %s133 = sadd.s32 %s132, 1
      %p136 = scmp.eq.s32.totalorder %s21, 7
      %p137 = scmp.ne.s32.totalorder %s132, %s134
      %p138 = scmp.eq.s32.totalorder %s21, 0
      %p139 = por %p137, %p138
      %p140 = scmp.ne.s32.totalorder %s132, %s134
      %p141 = scmp.eq.s32.totalorder %s26, 7
      %p142 = por %p140, %p141
      %p143 = scmp.ne.s32.totalorder %s134, %s135
      %p144 = scmp.eq.s32.totalorder %s26, 0
      %p145 = por %p143, %p144
      %p146 = scmp.ne.s32.totalorder %s134, %s135
      %p147 = scmp.eq.s32.totalorder %s27, 7
      %p148 = por %p146, %p147
      %p150 = scmp.ne.s32.totalorder %s135, %s149
      %p151 = scmp.eq.s32.totalorder %s27, 0
      %p152 = por %p150, %p151
      %s154 = sadd.s32 %s153, 1
      %p157 = scmp.eq.s32.totalorder %s21, 7
      %p158 = scmp.ne.s32.totalorder %s153, %s155
      %p159 = scmp.eq.s32.totalorder %s21, 0
      %p160 = por %p158, %p159
      %p161 = scmp.ne.s32.totalorder %s153, %s155
      %p162 = scmp.eq.s32.totalorder %s26, 7
      %p163 = por %p161, %p162
      %p164 = scmp.ne.s32.totalorder %s155, %s156
      %p165 = scmp.eq.s32.totalorder %s26, 0
      %p166 = por %p164, %p165
      %p167 = scmp.ne.s32.totalorder %s155, %s156
      %p168 = scmp.eq.s32.totalorder %s27, 7
      %p169 = por %p167, %p168
      %p171 = scmp.ne.s32.totalorder %s156, %s170
      %p172 = scmp.eq.s32.totalorder %s27, 0
      %p173 = por %p171, %p172
      %s174 = ssub.s32 %s28, %s40
      %p175 = scmp.eq.s32.totalorder %s174, 0
      %s177 = sadd.s32 %s176, 1
      %s178 = scalar_select %p175, %s176, %s177
      %p181 = pneg %p175
      %p182 = scmp.eq.s32.totalorder %s21, 7
      %p183 = por %p181, %p182
      %p184 = scmp.ne.s32.totalorder %s176, %s179
      %p185 = scmp.eq.s32.totalorder %s21, 0
      %p186 = por %p184, %p185
      %p187 = scmp.ne.s32.totalorder %s176, %s179
      %p188 = scmp.eq.s32.totalorder %s26, 7
      %p189 = por %p187, %p188
      %p190 = scmp.ne.s32.totalorder %s179, %s180
      %p191 = scmp.eq.s32.totalorder %s26, 0
      %p192 = por %p190, %p191
      %p193 = scmp.ne.s32.totalorder %s179, %s180
      %p194 = scmp.eq.s32.totalorder %s27, 7
      %p195 = por %p193, %p194
      %p197 = scmp.ne.s32.totalorder %s180, %s196
      %p198 = scmp.eq.s32.totalorder %s27, 0
      %p199 = por %p197, %p198
      %p200 = scmp.le.s32.totalorder 1, %s21
      %p201 = scmp.lt.s32.totalorder %s21, 9
      %p202 = pnand %p200, %p201
      %p203 = pneg %p202
      // Predicated region
      $region9: #{tpu_custom_call.1} parent=5 // pred_check
        _
      $region10: #{tpu_custom_call.1} parent=5 // pred_check_branch
        %205 = sbr.rel (%p202) target = $region12
      $region11: #{tpu_custom_call.1} parent=5 // pred_region
        %s206 = ssub.s32 %s21, 1
        // Predicated region
        $region13: #{tpu_custom_call.1} parent=11 // pred_check
          %p207 = pneg %p82
        $region14: #{tpu_custom_call.1} parent=11 // pred_check_branch
          %209 = sbr.rel (%p207) target = $region16
        $region15: #{tpu_custom_call.1} parent=11 // pred_region
          %211 = vsyncadd [#allocation8], 0
          %s212 = sshll.u32 %s1, 4
          %s213 = int_to_ptr.hbm [resolvable:$true] %s212
          %s214 = sshll.u32 [#allocation7], 4
          %s215 = int_to_ptr.vmem [resolvable:$true] %s214
          %220 = dma.hbm_to_vmem [thread:$0]  %s213, 256, %s215, [#allocation8], 128, 128, 8
        $region16: #{tpu_custom_call.1} parent=11 // pred_fallthru
          _
        // Predicated region
        $region17: #{tpu_custom_call.1} parent=11 // pred_check
          %p221 = pneg %p103
        $region18: #{tpu_custom_call.1} parent=11 // pred_check_branch
          %223 = sbr.rel (%p221) target = $region20
        $region19: #{tpu_custom_call.1} parent=11 // pred_region
          %225 = vsyncadd [#allocation8], 0
          %s226 = sshll.u32 %s2, 4
          %s227 = int_to_ptr.hbm [resolvable:$true] %s226
          %s228 = sshll.u32 [#allocation9], 4
          %s229 = int_to_ptr.vmem [resolvable:$true] %s228
          %234 = dma.hbm_to_vmem [thread:$0]  %s227, 256, %s229, [#allocation8], 128, 128, 8
        $region20: #{tpu_custom_call.1} parent=11 // pred_fallthru
          _
        // Predicated region
        $region21: #{tpu_custom_call.1} parent=11 // pred_check
          %p235 = pneg %p124
        $region22: #{tpu_custom_call.1} parent=11 // pred_check_branch
          %237 = sbr.rel (%p235) target = $region24
        $region23: #{tpu_custom_call.1} parent=11 // pred_region
          %239 = vsyncadd [#allocation11], 0
          %s240 = sshll.u32 %s3, 4
          %s241 = int_to_ptr.hbm [resolvable:$true] %s240
          %s242 = sshll.u32 [#allocation10], 4
          %s243 = int_to_ptr.vmem [resolvable:$true] %s242
          %248 = dma.hbm_to_vmem [thread:$0]  %s241, 256, %s243, [#allocation11], 128, 128, 8
        $region24: #{tpu_custom_call.1} parent=11 // pred_fallthru
          _
        // Predicated region
        $region25: #{tpu_custom_call.1} parent=11 // pred_check
          %p249 = pneg %p145
        $region26: #{tpu_custom_call.1} parent=11 // pred_check_branch
          %251 = sbr.rel (%p249) target = $region28
        $region27: #{tpu_custom_call.1} parent=11 // pred_region
          %253 = vsyncadd [#allocation11], 0
          %s254 = sshll.u32 %s4, 4
          %s255 = int_to_ptr.hbm [resolvable:$true] %s254
          %s256 = sshll.u32 [#allocation12], 4
          %s257 = int_to_ptr.vmem [resolvable:$true] %s256
          %262 = dma.hbm_to_vmem [thread:$0]  %s255, 256, %s257, [#allocation11], 128, 128, 8
        $region28: #{tpu_custom_call.1} parent=11 // pred_fallthru
          _
        // Predicated region
        $region29: #{tpu_custom_call.1} parent=11 // pred_check
          %p263 = pneg %p166
        $region30: #{tpu_custom_call.1} parent=11 // pred_check_branch
          %265 = sbr.rel (%p263) target = $region32
        $region31: #{tpu_custom_call.1} parent=11 // pred_region
          %267 = vsyncadd [#allocation14], 0
          %s268 = sshll.u32 %s5, 4
          %s269 = int_to_ptr.hbm [resolvable:$true] %s268
          %s270 = sshll.u32 [#allocation13], 4
          %s271 = int_to_ptr.vmem [resolvable:$true] %s270
          %276 = dma.hbm_to_vmem [thread:$0]  %s269, 256, %s271, [#allocation14], 128, 128, 8
        $region32: #{tpu_custom_call.1} parent=11 // pred_fallthru
          _
      $region12: #{tpu_custom_call.1} parent=5 // pred_fallthru
        _
      %p277 = scmp.lt.s32.totalorder %s21, 8
      // Predicated region
      $region33: #{tpu_custom_call.1} parent=5 // pred_check
        %p278 = pneg %p277
      $region34: #{tpu_custom_call.1} parent=5 // pred_check_branch
        %280 = sbr.rel (%p278) target = $region36
      $region35: #{tpu_custom_call.1} parent=5 // pred_region
        // Predicated region
        $region37: #{tpu_custom_call.1} parent=35 // pred_check
          %p281 = pneg %p55
        $region38: #{tpu_custom_call.1} parent=35 // pred_check_branch
          %283 = sbr.rel (%p281) target = $region40
        $region39: #{tpu_custom_call.1} parent=35 // pred_region
          %s284 = sand.u32 %s45, 1
          %s285 = scalar_lea.sflag [#allocation5], %s284
          %s286 = sand.u32 %s45, 1
          %s287 = smul.addr %s286, 16
          %s288 = scalar_lea.vmem [#allocation4], %s287
          %290 = vsyncadd %s285, 0
          %s291 = smul.addr %s28, 2
          %s292 = smul.addr %s29, 8
          %s293 = sadd.s32 %s291, %s292
          %s294 = smul.addr %s293, 8
          %s295 = scalar_lea.hbm %s0, %s294
          %s296 = sshll.u32 %s295, 4
          %s297 = int_to_ptr.hbm [resolvable:$true] %s296
          %s298 = sshll.u32 %s288, 4
          %s299 = int_to_ptr.vmem [resolvable:$true] %s298
          %304 = dma.hbm_to_vmem [thread:$0]  %s297, 256, %s299, %s285, 128, 128, 8
        $region40: #{tpu_custom_call.1} parent=35 // pred_fallthru
          _
      $region36: #{tpu_custom_call.1} parent=5 // pred_fallthru
        _
      %p305 = scmp.le.s32.totalorder 1, %s21
      %p306 = scmp.lt.s32.totalorder %s21, 9
      %p307 = pnand %p305, %p306
      %p308 = pneg %p307
      // Predicated region
      $region41: #{tpu_custom_call.1} parent=5 // pred_check
        _
      $region42: #{tpu_custom_call.1} parent=5 // pred_check_branch
        %310 = sbr.rel (%p307) target = $region44
      $region43: #{tpu_custom_call.1} parent=5 // pred_region
        %s311 = ssub.s32 %s21, 1
        %s312 = sand.u32 %s48, 1
        %s313 = scalar_lea.sflag [#allocation5], %s312
        %s314 = sand.u32 %s48, 1
        %s315 = smul.addr %s314, 16
        %s316 = scalar_lea.vmem [#allocation4], %s315
        // Predicated region
        $region45: #{tpu_custom_call.1} parent=43 // pred_check
          %p317 = pneg %p61
        $region46: #{tpu_custom_call.1} parent=43 // pred_check_branch
          %319 = sbr.rel (%p317) target = $region48
        $region47: #{tpu_custom_call.1} parent=43 // pred_region
          %321 = dma.done %s313, 256
        $region48: #{tpu_custom_call.1} parent=43 // pred_fallthru
          _
        // Predicated region
        $region49: #{tpu_custom_call.1} parent=43 // pred_check
          %p322 = pneg %p82
        $region50: #{tpu_custom_call.1} parent=43 // pred_check_branch
          %324 = sbr.rel (%p322) target = $region52
        $region51: #{tpu_custom_call.1} parent=43 // pred_region
          %326 = dma.done [#allocation8], 256
        $region52: #{tpu_custom_call.1} parent=43 // pred_fallthru
          _
        // Predicated region
        $region53: #{tpu_custom_call.1} parent=43 // pred_check
          %p327 = pneg %p103
        $region54: #{tpu_custom_call.1} parent=43 // pred_check_branch
          %329 = sbr.rel (%p327) target = $region56
        $region55: #{tpu_custom_call.1} parent=43 // pred_region
          %331 = dma.done [#allocation8], 256
        $region56: #{tpu_custom_call.1} parent=43 // pred_fallthru
          _
        // Predicated region
        $region57: #{tpu_custom_call.1} parent=43 // pred_check
          %p332 = pneg %p124
        $region58: #{tpu_custom_call.1} parent=43 // pred_check_branch
          %334 = sbr.rel (%p332) target = $region60
        $region59: #{tpu_custom_call.1} parent=43 // pred_region
          %336 = dma.done [#allocation11], 256
        $region60: #{tpu_custom_call.1} parent=43 // pred_fallthru
          _
        // Predicated region
        $region61: #{tpu_custom_call.1} parent=43 // pred_check
          %p337 = pneg %p145
        $region62: #{tpu_custom_call.1} parent=43 // pred_check_branch
          %339 = sbr.rel (%p337) target = $region64
        $region63: #{tpu_custom_call.1} parent=43 // pred_region
          %341 = dma.done [#allocation11], 256
        $region64: #{tpu_custom_call.1} parent=43 // pred_fallthru
          _
        // Predicated region
        $region65: #{tpu_custom_call.1} parent=43 // pred_check
          %p342 = pneg %p166
        $region66: #{tpu_custom_call.1} parent=43 // pred_check_branch
          %344 = sbr.rel (%p342) target = $region68
        $region67: #{tpu_custom_call.1} parent=43 // pred_region
          %346 = dma.done [#allocation14], 256
        $region68: #{tpu_custom_call.1} parent=43 // pred_fallthru
          _
        %s347 = sand.u32 %s48, 1
        %s348 = scalar_lea.sflag [#allocation5], %s347
        %s349 = sand.u32 %s48, 1
        %s350 = smul.addr %s349, 16
        %s351 = scalar_lea.vmem [#allocation4], %s350
        %p352 = pneg %p61
        %p353 = pneg %p58
        %p354 = pneg %p82
        %p355 = pneg %p79
        %p356 = pneg %p103
        %p357 = pneg %p100
        %p358 = pneg %p124
        %p359 = pneg %p121
        %p360 = pneg %p145
        %p361 = pneg %p142
        %p362 = pneg %p166
        %p363 = pneg %p163
        %p364 = pneg %p192
        %p365 = pneg %p189
        %s366 = sand.u32 %s179, 1
        %s367 = scalar_lea.sflag [#allocation6], %s366
        %s368 = sand.u32 %s179, 1
        %s369 = smul.addr %s368, 32
        %s370 = scalar_lea.vmem [#allocation15], %s369
        %v371 = vld [vmem:[%s316] sm:$0xff]
        %v372 = vld [vmem:[%s316 + $0x8] sm:$0xff]
        %v373 = vld [vmem:[#allocation7] sm:$0xff]
        %v374 = vld [vmem:[#allocation7 + $0x8] sm:$0xff]
        %v375 = vld [vmem:[#allocation9] sm:$0xff]
        %v376 = vld [vmem:[#allocation9 + $0x8] sm:$0xff]
        %v377 = vld [vmem:[#allocation10] sm:$0xff]
        %v378 = vld [vmem:[#allocation10 + $0x8] sm:$0xff]
        %v379 = vld [vmem:[#allocation12] sm:$0xff]
        %v380 = vld [vmem:[#allocation12 + $0x8] sm:$0xff]
        %v381 = vld [vmem:[#allocation13] sm:$0xff]
        %v382 = vld [vmem:[#allocation13 + $0x8] sm:$0xff]
        %p383 = scmp.eq.s32.totalorder %s31, 0
        // Predicated region
        $region69: #{tpu_custom_call.1} parent=43 // pred_check
          %p384 = pneg %p383
        $region70: #{tpu_custom_call.1} parent=43 // pred_check_branch
          %386 = sbr.rel (%p384) target = $region72
        $region71: #{tpu_custom_call.1} parent=43 // pred_region
          %vm387 = vcmask 0
          %388 = vst.msk [vmem:[#allocation2] sm:$0x1] %vm387, 0.0
          %389 = vst.msk [vmem:[#allocation3] sm:$0x1] %vm387, 0.0
        $region72: #{tpu_custom_call.1} parent=43 // pred_fallthru
          _
        %v390 = vld [vmem:[#allocation2] sm:$0x1]
        %vm391 = vcmask 130048
        %v392 = vsel %vm391, %v371, 0.0
        %v393 = vsel %vm391, %v372, 0.0
        %v394 = vadd.f32 %v392, %v393
        %395 = vadd.xlane.f32.xlu0 %v394
        %v396 = vpop.xlane.xlu0 %395
        %v397 = vrot.slane %v396, 4
        %v398 = vadd.f32 %v396, %v397
        %v399 = vrot.slane %v398, 2
        %v400 = vadd.f32 %v398, %v399
        %v401 = vrot.slane %v400, 1
        %v402 = vadd.f32 %v400, %v401
        %s403 = vtos %v402
        %v404 = vstv %s403
        %v405 = vadd.f32 %v390, %v404
        %vm406 = vcmask 0
        %407 = vst.msk [vmem:[#allocation2] sm:$0x1] %vm406, %v405
        %v408 = vld [vmem:[#allocation3] sm:$0x1]
        %v409 = vmul.f32 %v371, %v371
        %v410 = vmul.f32 %v372, %v372
        %v411 = vsel %vm391, %v409, 0.0
        %v412 = vsel %vm391, %v410, 0.0
        %v413 = vadd.f32 %v411, %v412
        %414 = vadd.xlane.f32.xlu0 %v413
        %v415 = vpop.xlane.xlu0 %414
        %v416 = vrot.slane %v415, 4
        %v417 = vadd.f32 %v415, %v416
        %v418 = vrot.slane %v417, 2
        %v419 = vadd.f32 %v417, %v418
        %v420 = vrot.slane %v419, 1
        %v421 = vadd.f32 %v419, %v420
        %s422 = vtos %v421
        %v423 = vstv %s422
        %v424 = vadd.f32 %v408, %v423
        %425 = vst.msk [vmem:[#allocation3] sm:$0x1] %vm406, %v424
        %v426 = vlaneseq
        %v427 = vshrl.u32 %v426, 7
        %v428 = vadd.s32 %v427, 8
        %v429 = vlaneseq
        %v430 = vand.u32 %v429, 127
        %v431 = vadd.s32 %v428, 8
        %vm432 = vcmp.lt.s32.totalorder %v428, 0
        %v433 = vsub.s32 0, %v428
        %v434 = vsel %vm432, %v433, %v428
        %v435 = vshrl.u32 %v434, 4
        %v436 = vand.u32 %v434, 15
        %v437 = vsub.s32 0, %v436
        %v438 = vsel %vm432, %v437, %v436
        %vm439 = vcmp.lt.s32.totalorder %v431, 0
        %v440 = vsub.s32 0, %v431
        %v441 = vsel %vm439, %v440, %v431
        %v442 = vshrl.u32 %v441, 4
        %v443 = vand.u32 %v441, 15
        %v444 = vsub.s32 0, %v443
        %v445 = vsel %vm439, %v444, %v443
        %vm446 = vcmp.ne.s32.totalorder %v438, 0
        %vm447 = vcmp.ne.s32.totalorder %v445, 0
        %vm448 = vcmp.lt.s32.totalorder %v438, 0
        %vm449 = vcmp.lt.s32.totalorder %v445, 0
        %vm450 = vmand %vm448, %vm446
        %vm451 = vmand %vm449, %vm447
        %v452 = vadd.s32 %v438, 16
        %v453 = vadd.s32 %v445, 16
        %v454 = vsel %vm450, %v452, %v438
        %v455 = vsel %vm451, %v453, %v445
        %v456 = vadd.s32 %v430, 8
        %vm457 = vcmp.lt.s32.totalorder %v456, 0
        %v458 = vsub.s32 0, %v456
        %v459 = vsel %vm457, %v458, %v456
        %v460 = vshrl.u32 %v459, 4
        %v461 = vand.u32 %v459, 15
        %v462 = vsub.s32 0, %v461
        %v463 = vsel %vm457, %v462, %v461
        %vm464 = vcmp.ne.s32.totalorder %v463, 0
        %vm465 = vcmp.lt.s32.totalorder %v463, 0
        %vm466 = vmand %vm465, %vm464
        %v467 = vadd.s32 %v463, 16
        %v468 = vsel %vm466, %v467, %v463
        %v469 = vcvt.s32.f32 %v454
        %v470 = vcvt.s32.f32 %v455
        %v471 = vmul.f32 %v469, 0.13333334
        %v472 = vmul.f32 %v470, 0.13333334
        %v473 = vadd.f32 %v471, -1.0
        %v474 = vadd.f32 %v472, -1.0
        %v475 = vcvt.s32.f32 %v468
        %v476 = vmul.f32 %v475, 0.13333334
        %v477 = vadd.f32 %v476, -1.0
        %v478 = vmul.f32 %v477, %v477
        %v479 = vmul.f32 %v473, %v473
        %v480 = vmul.f32 %v474, %v474
        %v481 = vadd.f32 %v478, %v479
        %v482 = vadd.f32 %v478, %v480
        %vm483 = vcmp.gt.f32.partialorder %v481, 0.01
        %vm484 = vcmp.gt.f32.partialorder %v482, 0.01
        %v485 = vsel %vm483, 0.001953125, 0.0
        %v486 = vsel %vm484, 0.001953125, 0.0
        %v488 = vsel %vm391, %v371, 0
        %v491 = vsel %vm391, %v372, 0
        %493 = vmatpush.msra.mxu0 0.0
        %494 = vmatpush.msra.mxu0 0.0
        %495 = vmatpush.msra.mxu0 0.0
        %496 = vmatpush.msra.mxu0 0.0
        %497 = vmatpush.msra.mxu0 0.0
        %498 = vmatpush.msra.mxu0 0.0
        %499 = vmatpush.msra.mxu0 0.0
        %500 = vmatpush.msra.mxu0 0.0
        %501 = vmatpush.msra.mxu0 0.0
        %502 = vmatpush.msra.mxu0 0.0
        %503 = vmatpush.msra.mxu0 0.0
        %504 = vmatpush.msra.mxu0 0.0
        %505 = vmatpush.msra.mxu0 0.0
        %506 = vmatpush.msra.mxu0 0.0
        %507 = vmatpush.msra.mxu0 %v374
        %508 = vmatpush.msra.mxu0 %v373
        %509 = vmatmul.f32.gmra.mxu0 %v488
        %v510 = vpop.f32.mrf.mxu0
        %v511 = vadd.f32 0.0, %v510
        %512 = vmatmul.f32.gmra.mxu0 %v491
        %v513 = vpop.f32.mrf.mxu0
        %v514 = vadd.f32 0.0, %v513
        %515 = vdwg.mxu0
        %516 = vmatpush.msra.mxu0 0.0
        %517 = vmatpush.msra.mxu0 0.0
        %518 = vmatpush.msra.mxu0 0.0
        %519 = vmatpush.msra.mxu0 0.0
        %520 = vmatpush.msra.mxu0 0.0
        %521 = vmatpush.msra.mxu0 0.0
        %522 = vmatpush.msra.mxu0 0.0
        %523 = vmatpush.msra.mxu0 0.0
        %524 = vmatpush.msra.mxu0 0.0
        %525 = vmatpush.msra.mxu0 0.0
        %526 = vmatpush.msra.mxu0 0.0
        %527 = vmatpush.msra.mxu0 0.0
        %528 = vmatpush.msra.mxu0 0.0
        %529 = vmatpush.msra.mxu0 0.0
        %530 = vmatpush.msra.mxu0 %v376
        %531 = vmatpush.msra.mxu0 %v375
        %532 = vmatmul.f32.gmra.mxu0 %v488
        %v533 = vpop.f32.mrf.mxu0
        %v534 = vadd.f32 0.0, %v533
        %535 = vmatmul.f32.gmra.mxu0 %v491
        %v536 = vpop.f32.mrf.mxu0
        %v537 = vadd.f32 0.0, %v536
        %538 = vdwg.mxu0
        %v540 = vsel %vm391, %v377, 0
        %v543 = vsel %vm391, %v378, 0
        %545 = vmatpush.msra.mxu0 0.0
        %546 = vmatpush.msra.mxu0 0.0
        %547 = vmatpush.msra.mxu0 0.0
        %548 = vmatpush.msra.mxu0 0.0
        %549 = vmatpush.msra.mxu0 0.0
        %550 = vmatpush.msra.mxu0 0.0
        %551 = vmatpush.msra.mxu0 0.0
        %552 = vmatpush.msra.mxu0 0.0
        %553 = vmatpush.msra.mxu0 0.0
        %554 = vmatpush.msra.mxu0 0.0
        %555 = vmatpush.msra.mxu0 0.0
        %556 = vmatpush.msra.mxu0 0.0
        %557 = vmatpush.msra.mxu0 0.0
        %558 = vmatpush.msra.mxu0 0.0
        %559 = vmatpush.msra.mxu0 %v514
        %560 = vmatpush.msra.mxu0 %v511
        %561 = vmatmul.f32.gmra.mxu0 %v540
        %v562 = vpop.f32.mrf.mxu0
        %v563 = vadd.f32 0.0, %v562
        %564 = vmatmul.f32.gmra.mxu0 %v543
        %v565 = vpop.f32.mrf.mxu0
        %v566 = vadd.f32 0.0, %v565
        %567 = vdwg.mxu0
        %v569 = vsel %vm391, %v379, 0
        %v572 = vsel %vm391, %v380, 0
        %574 = vmatpush.msra.mxu0 0.0
        %575 = vmatpush.msra.mxu0 0.0
        %576 = vmatpush.msra.mxu0 0.0
        %577 = vmatpush.msra.mxu0 0.0
        %578 = vmatpush.msra.mxu0 0.0
        %579 = vmatpush.msra.mxu0 0.0
        %580 = vmatpush.msra.mxu0 0.0
        %581 = vmatpush.msra.mxu0 0.0
        %582 = vmatpush.msra.mxu0 0.0
        %583 = vmatpush.msra.mxu0 0.0
        %584 = vmatpush.msra.mxu0 0.0
        %585 = vmatpush.msra.mxu0 0.0
        %586 = vmatpush.msra.mxu0 0.0
        %587 = vmatpush.msra.mxu0 0.0
        %588 = vmatpush.msra.mxu0 %v537
        %589 = vmatpush.msra.mxu0 %v534
        %590 = vmatmul.f32.gmra.mxu0 %v569
        %v591 = vpop.f32.mrf.mxu0
        %v592 = vadd.f32 0.0, %v591
        %593 = vmatmul.f32.gmra.mxu0 %v572
        %v594 = vpop.f32.mrf.mxu0
        %v595 = vadd.f32 0.0, %v594
        %596 = vdwg.mxu0
        %v597 = vsub.f32 %v563, %v592
        %v598 = vsub.f32 %v566, %v595
        %v599 = vmul.f32 %v597, %v485
        %v600 = vmul.f32 %v598, %v486
        %601 = vmatpush.msra.mxu0 0.0
        %602 = vmatpush.msra.mxu0 0.0
        %603 = vmatpush.msra.mxu0 0.0
        %604 = vmatpush.msra.mxu0 0.0
        %605 = vmatpush.msra.mxu0 0.0
        %606 = vmatpush.msra.mxu0 0.0
        %607 = vmatpush.msra.mxu0 0.0
        %608 = vmatpush.msra.mxu0 0.0
        %609 = vmatpush.msra.mxu0 0.0
        %610 = vmatpush.msra.mxu0 0.0
        %611 = vmatpush.msra.mxu0 0.0
        %612 = vmatpush.msra.mxu0 0.0
        %613 = vmatpush.msra.mxu0 0.0
        %614 = vmatpush.msra.mxu0 0.0
        %615 = vmatpush.msra.mxu0 %v514
        %616 = vmatpush.msra.mxu0 %v511
        %617 = vmatmul.f32.gmra.mxu0 %v569
        %v618 = vpop.f32.mrf.mxu0
        %v619 = vadd.f32 0.0, %v618
        %620 = vmatmul.f32.gmra.mxu0 %v572
        %v621 = vpop.f32.mrf.mxu0
        %v622 = vadd.f32 0.0, %v621
        %623 = vdwg.mxu0
        %624 = vmatpush.msra.mxu0 0.0
        %625 = vmatpush.msra.mxu0 0.0
        %626 = vmatpush.msra.mxu0 0.0
        %627 = vmatpush.msra.mxu0 0.0
        %628 = vmatpush.msra.mxu0 0.0
        %629 = vmatpush.msra.mxu0 0.0
        %630 = vmatpush.msra.mxu0 0.0
        %631 = vmatpush.msra.mxu0 0.0
        %632 = vmatpush.msra.mxu0 0.0
        %633 = vmatpush.msra.mxu0 0.0
        %634 = vmatpush.msra.mxu0 0.0
        %635 = vmatpush.msra.mxu0 0.0
        %636 = vmatpush.msra.mxu0 0.0
        %637 = vmatpush.msra.mxu0 0.0
        %638 = vmatpush.msra.mxu0 %v537
        %639 = vmatpush.msra.mxu0 %v534
        %640 = vmatmul.f32.gmra.mxu0 %v540
        %v641 = vpop.f32.mrf.mxu0
        %v642 = vadd.f32 %v619, %v641
        %643 = vmatmul.f32.gmra.mxu0 %v543
        %v644 = vpop.f32.mrf.mxu0
        %v645 = vadd.f32 %v622, %v644
        %646 = vdwg.mxu0
        %v647 = vmul.f32 %v642, %v485
        %v648 = vmul.f32 %v645, %v486
        %649 = vmatpush.msra.mxu0 0.0
        %650 = vmatpush.msra.mxu0 0.0
        %651 = vmatpush.msra.mxu0 0.0
        %652 = vmatpush.msra.mxu0 0.0
        %653 = vmatpush.msra.mxu0 0.0
        %654 = vmatpush.msra.mxu0 0.0
        %655 = vmatpush.msra.mxu0 0.0
        %656 = vmatpush.msra.mxu0 0.0
        %657 = vmatpush.msra.mxu0 0.0
        %658 = vmatpush.msra.mxu0 0.0
        %659 = vmatpush.msra.mxu0 0.0
        %660 = vmatpush.msra.mxu0 0.0
        %661 = vmatpush.msra.mxu0 0.0
        %662 = vmatpush.msra.mxu0 0.0
        %663 = vmatpush.msra.mxu0 %v648
        %664 = vmatpush.msra.mxu0 %v647
        %665 = vmatmul.f32.gmra.mxu0 %v569
        %v666 = vpop.f32.mrf.mxu0
        %v667 = vadd.f32 0.0, %v666
        %668 = vmatmul.f32.gmra.mxu0 %v572
        %v669 = vpop.f32.mrf.mxu0
        %v670 = vadd.f32 0.0, %v669
        %671 = vdwg.mxu0
        %672 = vmatpush.msra.mxu0 0.0
        %673 = vmatpush.msra.mxu0 0.0
        %674 = vmatpush.msra.mxu0 0.0
        %675 = vmatpush.msra.mxu0 0.0
        %676 = vmatpush.msra.mxu0 0.0
        %677 = vmatpush.msra.mxu0 0.0
        %678 = vmatpush.msra.mxu0 0.0
        %679 = vmatpush.msra.mxu0 0.0
        %680 = vmatpush.msra.mxu0 0.0
        %681 = vmatpush.msra.mxu0 0.0
        %682 = vmatpush.msra.mxu0 0.0
        %683 = vmatpush.msra.mxu0 0.0
        %684 = vmatpush.msra.mxu0 0.0
        %685 = vmatpush.msra.mxu0 0.0
        %686 = vmatpush.msra.mxu0 %v600
        %687 = vmatpush.msra.mxu0 %v599
        %688 = vmatmul.f32.gmra.mxu0 %v540
        %v689 = vpop.f32.mrf.mxu0
        %v690 = vadd.f32 %v667, %v689
        %691 = vmatmul.f32.gmra.mxu0 %v543
        %v692 = vpop.f32.mrf.mxu0
        %v693 = vadd.f32 %v670, %v692
        %694 = vdwg.mxu0
        %695 = vmatpush.msra.mxu0 0.0
        %696 = vmatpush.msra.mxu0 0.0
        %697 = vmatpush.msra.mxu0 0.0
        %698 = vmatpush.msra.mxu0 0.0
        %699 = vmatpush.msra.mxu0 0.0
        %700 = vmatpush.msra.mxu0 0.0
        %701 = vmatpush.msra.mxu0 0.0
        %702 = vmatpush.msra.mxu0 0.0
        %703 = vmatpush.msra.mxu0 0.0
        %704 = vmatpush.msra.mxu0 0.0
        %705 = vmatpush.msra.mxu0 0.0
        %706 = vmatpush.msra.mxu0 0.0
        %707 = vmatpush.msra.mxu0 0.0
        %708 = vmatpush.msra.mxu0 0.0
        %709 = vmatpush.msra.mxu0 %v648
        %710 = vmatpush.msra.mxu0 %v647
        %711 = vmatmul.f32.gmra.mxu0 %v540
        %v712 = vpop.f32.mrf.mxu0
        %v713 = vadd.f32 0.0, %v712
        %714 = vmatmul.f32.gmra.mxu0 %v543
        %v715 = vpop.f32.mrf.mxu0
        %v716 = vadd.f32 0.0, %v715
        %717 = vdwg.mxu0
        %718 = vmatpush.msra.mxu0 0.0
        %719 = vmatpush.msra.mxu0 0.0
        %720 = vmatpush.msra.mxu0 0.0
        %721 = vmatpush.msra.mxu0 0.0
        %722 = vmatpush.msra.mxu0 0.0
        %723 = vmatpush.msra.mxu0 0.0
        %724 = vmatpush.msra.mxu0 0.0
        %725 = vmatpush.msra.mxu0 0.0
        %726 = vmatpush.msra.mxu0 0.0
        %727 = vmatpush.msra.mxu0 0.0
        %728 = vmatpush.msra.mxu0 0.0
        %729 = vmatpush.msra.mxu0 0.0
        %730 = vmatpush.msra.mxu0 0.0
        %731 = vmatpush.msra.mxu0 0.0
        %732 = vmatpush.msra.mxu0 %v600
        %733 = vmatpush.msra.mxu0 %v599
        %734 = vmatmul.f32.gmra.mxu0 %v569
        %v735 = vpop.f32.mrf.mxu0
        %v736 = vadd.f32 0.0, %v735
        %737 = vmatmul.f32.gmra.mxu0 %v572
        %v738 = vpop.f32.mrf.mxu0
        %v739 = vadd.f32 0.0, %v738
        %740 = vdwg.mxu0
        %v741 = vsub.f32 %v713, %v736
        %v742 = vsub.f32 %v716, %v739
        %v744 = vsel %vm391, %v741, 0
        %v747 = vsel %vm391, %v742, 0
        %749 = vmatpush.msra.mxu0 0.0
        %750 = vmatpush.msra.mxu0 0.0
        %751 = vmatpush.msra.mxu0 0.0
        %752 = vmatpush.msra.mxu0 0.0
        %753 = vmatpush.msra.mxu0 0.0
        %754 = vmatpush.msra.mxu0 0.0
        %755 = vmatpush.msra.mxu0 0.0
        %756 = vmatpush.msra.mxu0 0.0
        %757 = vmatpush.msra.mxu0 0.0
        %758 = vmatpush.msra.mxu0 0.0
        %759 = vmatpush.msra.mxu0 0.0
        %760 = vmatpush.msra.mxu0 0.0
        %761 = vmatpush.msra.mxu0 0.0
        %762 = vmatpush.msra.mxu0 0.0
        %763 = vmatpush.msra.mxu0 %v376
        %764 = vmatpush.msra.mxu0 %v375
        %765 = vmatmul.f32.gmra.mxu0 %v744
        %v766 = vpop.f32.mrf.mxu0
        %v767 = vadd.f32 0.0, %v766
        %768 = vmatmul.f32.gmra.mxu0 %v747
        %v769 = vpop.f32.mrf.mxu0
        %v770 = vadd.f32 0.0, %v769
        %771 = vdwg.mxu0
        %v773 = vsel %vm391, %v690, 0
        %v776 = vsel %vm391, %v693, 0
        %778 = vmatpush.msra.mxu0 0.0
        %779 = vmatpush.msra.mxu0 0.0
        %780 = vmatpush.msra.mxu0 0.0
        %781 = vmatpush.msra.mxu0 0.0
        %782 = vmatpush.msra.mxu0 0.0
        %783 = vmatpush.msra.mxu0 0.0
        %784 = vmatpush.msra.mxu0 0.0
        %785 = vmatpush.msra.mxu0 0.0
        %786 = vmatpush.msra.mxu0 0.0
        %787 = vmatpush.msra.mxu0 0.0
        %788 = vmatpush.msra.mxu0 0.0
        %789 = vmatpush.msra.mxu0 0.0
        %790 = vmatpush.msra.mxu0 0.0
        %791 = vmatpush.msra.mxu0 0.0
        %792 = vmatpush.msra.mxu0 %v374
        %793 = vmatpush.msra.mxu0 %v373
        %794 = vmatmul.f32.gmra.mxu0 %v773
        %v795 = vpop.f32.mrf.mxu0
        %v796 = vadd.f32 %v767, %v795
        %797 = vmatmul.f32.gmra.mxu0 %v776
        %v798 = vpop.f32.mrf.mxu0
        %v799 = vadd.f32 %v770, %v798
        %800 = vdwg.mxu0
        %vm801 = vcmask 1047680
        %802 = vrot.lane.b32.xlu0 %v371, 16
        %v803 = vpop.permute.xlu0 %802
        %v804 = vsel %vm801, %v803, %v371
        %805 = vrot.lane.b32.xlu0 %v372, 16
        %v806 = vpop.permute.xlu0 %805
        %v807 = vsel %vm801, %v806, %v372
        %808 = vrot.lane.b32.xlu0 %v804, 16
        %v809 = vpop.permute.xlu0 %808
        %810 = vrot.lane.b32.xlu0 %v807, 16
        %v811 = vpop.permute.xlu0 %810
        %v812 = vsel %vm801, %v809, %v371
        %v813 = vsel %vm801, %v811, %v372
        %814 = vrot.lane.b32.xlu0 %v430, 16
        %v815 = vpop.permute.xlu0 %814
        %v816 = vsel %vm801, %v815, %v430
        %817 = vrot.lane.b32.xlu0 %v816, 16
        %v818 = vpop.permute.xlu0 %817
        %v819 = vsel %vm801, %v818, %v430
        %v820 = vadd.s32 %v430, 15
        %vm821 = vcmp.lt.s32.totalorder %v820, 0
        %v822 = vsub.s32 0, %v820
        %v823 = vsel %vm821, %v822, %v820
        %v824 = vshrl.u32 %v823, 4
        %v825 = vand.u32 %v823, 15
        %v826 = vsub.s32 0, %v825
        %v827 = vsel %vm821, %v826, %v825
        %vm828 = vcmp.ne.s32.totalorder %v827, 0
        %vm829 = vcmp.lt.s32.totalorder %v827, 0
        %vm830 = vmand %vm829, %vm828
        %v831 = vadd.s32 %v827, 16
        %v832 = vsel %vm830, %v831, %v827
        %833 = vrot.lane.b32.xlu0 %v832, 15
        %v834 = vpop.permute.xlu0 %833
        %vm835 = vcmp.eq.s32.totalorder %v819, %v834
        %838 = vrot.lane.b32.xlu0 %v812, 14
        %v839 = vpop.permute.xlu0 %838
        %840 = vrot.lane.b32.xlu0 %v813, 14
        %v841 = vpop.permute.xlu0 %840
        %v844 = vsel %vm835, %v812, %v839
        %v845 = vsel %vm835, %v813, %v841
        %v846 = vsel %vm835, %v839, %v812
        %v847 = vsel %vm835, %v841, %v813
        %vm848 = vcmp.eq.s32.totalorder %v430, 0
        %851 = vrot.lane.b32.xlu0 %v846, 113
        %v852 = vpop.permute.xlu0 %851
        %853 = vrot.lane.b32.xlu0 %v847, 113
        %v854 = vpop.permute.xlu0 %853
        %859 = vrot.lane.b32.xlu0 %v844, 113
        %v860 = vpop.permute.xlu0 %859
        %861 = vrot.lane.b32.xlu0 %v845, 113
        %v862 = vpop.permute.xlu0 %861
        %v865 = vsel %vm848, %v852, %v860
        %v866 = vsel %vm848, %v854, %v862
        %vm867 = vcmp.eq.s32.totalorder %v430, 15
        %v868 = vsel %vm867, %v860, %v852
        %v869 = vsel %vm867, %v862, %v854
        %v870 = vmul.f32 %v371, 0.54328805
        %v871 = vmul.f32 %v372, 0.54328805
        %v872 = vmul.f32 %v865, 0.08331592
        %v873 = vmul.f32 %v866, 0.08331592
        %v874 = vadd.f32 %v870, %v872
        %v875 = vadd.f32 %v871, %v873
        %v876 = vmul.f32 %v868, 0.37339604
        %v877 = vmul.f32 %v869, 0.37339604
        %v878 = vadd.f32 %v874, %v876
        %v879 = vadd.f32 %v875, %v877
        %v881 = vsel %vm391, %v381, 0
        %v884 = vsel %vm391, %v382, 0
        %886 = vmatpush.msra.mxu0 0.0
        %887 = vmatpush.msra.mxu0 0.0
        %888 = vmatpush.msra.mxu0 0.0
        %889 = vmatpush.msra.mxu0 0.0
        %890 = vmatpush.msra.mxu0 0.0
        %891 = vmatpush.msra.mxu0 0.0
        %892 = vmatpush.msra.mxu0 0.0
        %893 = vmatpush.msra.mxu0 0.0
        %894 = vmatpush.msra.mxu0 0.0
        %895 = vmatpush.msra.mxu0 0.0
        %896 = vmatpush.msra.mxu0 0.0
        %897 = vmatpush.msra.mxu0 0.0
        %898 = vmatpush.msra.mxu0 0.0
        %899 = vmatpush.msra.mxu0 0.0
        %900 = vmatpush.msra.mxu0 %v879
        %901 = vmatpush.msra.mxu0 %v878
        %902 = vmatmul.f32.gmra.mxu0 %v881
        %v903 = vpop.f32.mrf.mxu0
        %v904 = vadd.f32 0.0, %v903
        %905 = vmatmul.f32.gmra.mxu0 %v884
        %v906 = vpop.f32.mrf.mxu0
        %v907 = vadd.f32 0.0, %v906
        %908 = vdwg.mxu0
        %v909 = vadd.f32 %v796, %v904
        %v910 = vadd.f32 %v799, %v907
        %s911 = smul.u32 %s31, 16
        %s912 = scalar_lea.vmem %s370, %s911 [#allocation15]
        %913 = vst.msk [vmem:[%s912] sm:$0xff] %vm391, %v909
        %914 = vst.msk [vmem:[%s912 + $0x8] sm:$0xff] %vm391, %v910
        %p915 = scmp.eq.s32.totalorder %s31, 1
        // Predicated region
        $region73: #{tpu_custom_call.1} parent=43 // pred_check
          %p916 = pneg %p915
        $region74: #{tpu_custom_call.1} parent=43 // pred_check_branch
          %918 = sbr.rel (%p916) target = $region76
        $region75: #{tpu_custom_call.1} parent=43 // pred_region
          %v919 = vld [vmem:[%s370] sm:$0xff]
          %v920 = vld [vmem:[%s370 + $0x8] sm:$0xff]
          %v921 = vld [vmem:[%s370 + $0x10] sm:$0xff]
          %v922 = vld [vmem:[%s370 + $0x18] sm:$0xff]
          %v923 = vld [vmem:[#allocation2] sm:$0x1]
          %s924 = vtos %v923
          %v925 = vrcp.pop 512.0
          %v926 = vmul.f32 512.0, %v925
          %v927 = vsub.f32 1.0, %v926
          %v928 = vmul.f32 %v925, %v927
          %v929 = vadd.f32 %v925, %v928
          %vm930 = vweird.f32 %v925
          %v931 = vsel %vm930, %v925, %v929
          %s932 = vtos %v931
          %s933 = smul.f32 %s924, %s932
          %v934 = vld [vmem:[#allocation3] sm:$0x1]
          %s935 = vtos %v934
          %s936 = smul.f32 %s924, %s933
          %s937 = ssub.f32 %s935, %s936
          %v938 = vrcp.pop 511.0
          %v939 = vmul.f32 511.0, %v938
          %v940 = vsub.f32 1.0, %v939
          %v941 = vmul.f32 %v938, %v940
          %v942 = vadd.f32 %v938, %v941
          %vm943 = vweird.f32 %v938
          %v944 = vsel %vm943, %v938, %v942
          %s945 = vtos %v944
          %s946 = smul.f32 %s937, %s945
          %v947 = vsel %vm391, %v919, 0.0
          %v948 = vsel %vm391, %v920, 0.0
          %v949 = vadd.f32 %v947, %v948
          %v950 = vsel %vm391, %v921, 0.0
          %v951 = vadd.f32 %v949, %v950
          %v952 = vsel %vm391, %v922, 0.0
          %v953 = vadd.f32 %v951, %v952
          %954 = vadd.xlane.f32.xlu0 %v953
          %v955 = vpop.xlane.xlu0 %954
          %v956 = vrot.slane %v955, 4
          %v957 = vadd.f32 %v955, %v956
          %v958 = vrot.slane %v957, 2
          %v959 = vadd.f32 %v957, %v958
          %v960 = vrot.slane %v959, 1
          %v961 = vadd.f32 %v959, %v960
          %s962 = vtos %v961
          %v963 = vrcp.pop 512.0
          %v964 = vmul.f32 512.0, %v963
          %v965 = vsub.f32 1.0, %v964
          %v966 = vmul.f32 %v963, %v965
          %v967 = vadd.f32 %v963, %v966
          %vm968 = vweird.f32 %v963
          %v969 = vsel %vm968, %v963, %v967
          %s970 = vtos %v969
          %s971 = smul.f32 %s962, %s970
          %v972 = vmul.f32 %v919, %v919
          %v973 = vmul.f32 %v920, %v920
          %v974 = vmul.f32 %v921, %v921
          %v975 = vmul.f32 %v922, %v922
          %v976 = vsel %vm391, %v972, 0.0
          %v977 = vsel %vm391, %v973, 0.0
          %v978 = vadd.f32 %v976, %v977
          %v979 = vsel %vm391, %v974, 0.0
          %v980 = vadd.f32 %v978, %v979
          %v981 = vsel %vm391, %v975, 0.0
          %v982 = vadd.f32 %v980, %v981
          %983 = vadd.xlane.f32.xlu0 %v982
          %v984 = vpop.xlane.xlu0 %983
          %v985 = vrot.slane %v984, 4
          %v986 = vadd.f32 %v984, %v985
          %v987 = vrot.slane %v986, 2
          %v988 = vadd.f32 %v986, %v987
          %v989 = vrot.slane %v988, 1
          %v990 = vadd.f32 %v988, %v989
          %s991 = vtos %v990
          %s992 = smul.f32 %s962, %s971
          %s993 = ssub.f32 %s991, %s992
          %v994 = vrcp.pop 511.0
          %v995 = vmul.f32 511.0, %v994
          %v996 = vsub.f32 1.0, %v995
          %v997 = vmul.f32 %v994, %v996
          %v998 = vadd.f32 %v994, %v997
          %vm999 = vweird.f32 %v994
          %v1000 = vsel %vm999, %v994, %v998
          %s1001 = vtos %v1000
          %s1002 = smul.f32 %s993, %s1001
          %v1003 = vstv %s946
          %v1004 = vrsqrt.pop %v1003
          %v1005 = vmul.f32 %v1004, %v1003
          %v1006 = vmul.f32 %v1005, %v1004
          %v1007 = vmul.f32 0.5, %v1006
          %v1008 = vsub.f32 1.5, %v1007
          %v1009 = vmul.f32 %v1004, %v1008
          %v1010 = vmul.f32 %v1003, %v1009
          %vm1011 = vcmp.eq.f32.partialorder %v1003, inf
          %v1012 = vsel %vm1011, %v1003, %v1010
          %vm1013 = vcmp.eq.f32.partialorder %v1003, 0.0
          %v1014 = vand.u32 %v1003, 2147483648
          %v1015 = vsel %vm1013, %v1014, %v1012
          %s1016 = vtos %v1015
          %s1017 = smax.f32 %s1002, 1e-24
          %v1018 = vstv %s1017
          %v1019 = vrsqrt.pop %v1018
          %v1020 = vmul.f32 %v1019, %v1018
          %v1021 = vmul.f32 %v1020, %v1019
          %v1022 = vmul.f32 0.5, %v1021
          %v1023 = vsub.f32 1.5, %v1022
          %v1024 = vmul.f32 %v1019, %v1023
          %v1025 = vmul.f32 %v1018, %v1024
          %vm1026 = vcmp.eq.f32.partialorder %v1018, inf
          %v1027 = vsel %vm1026, %v1018, %v1025
          %vm1028 = vcmp.eq.f32.partialorder %v1018, 0.0
          %v1029 = vand.u32 %v1018, 2147483648
          %v1030 = vsel %vm1028, %v1029, %v1027
          %s1031 = vtos %v1030
          %v1032 = vstv %s1031
          %v1033 = vrcp.pop %v1032
          %v1034 = vmul.f32 %v1032, %v1033
          %v1035 = vsub.f32 1.0, %v1034
          %v1036 = vmul.f32 %v1033, %v1035
          %v1037 = vadd.f32 %v1033, %v1036
          %vm1038 = vweird.f32 %v1032
          %vm1039 = vweird.f32 %v1033
          %vm1040 = vmor %vm1038, %vm1039
          %v1041 = vsel %vm1040, %v1033, %v1037
          %v1042 = vand.u32 2147483647, %v1032
          %vm1043 = vcmp.eq.f32.partialorder %v1042, 8.507059e+37
          %v1044 = vand.u32 %v1032, 2147483648
          %v1045 = vor.u32 1.1754944e-38, %v1044
          %v1046 = vsel %vm1043, %v1045, %v1041
          %s1047 = vtos %v1046
          %s1048 = smul.f32 %s1016, %s1047
          %v1049 = vstv %s971
          %v1050 = vsub.f32 %v919, %v1049
          %v1051 = vsub.f32 %v920, %v1049
          %v1052 = vsub.f32 %v921, %v1049
          %v1053 = vsub.f32 %v922, %v1049
          %v1054 = vstv %s1048
          %v1055 = vmul.f32 %v1050, %v1054
          %v1056 = vmul.f32 %v1051, %v1054
          %v1057 = vmul.f32 %v1052, %v1054
          %v1058 = vmul.f32 %v1053, %v1054
          %v1059 = vstv %s933
          %v1060 = vadd.f32 %v1055, %v1059
          %v1061 = vadd.f32 %v1056, %v1059
          %v1062 = vadd.f32 %v1057, %v1059
          %v1063 = vadd.f32 %v1058, %v1059
          %v1064 = vmax.f32 %v1060, 0.0
          %v1065 = vmax.f32 %v1061, 0.0
          %v1066 = vmax.f32 %v1062, 0.0
          %v1067 = vmax.f32 %v1063, 0.0
          %v1068 = vmin.f32 %v1064, 1.0
          %v1069 = vmin.f32 %v1065, 1.0
          %v1070 = vmin.f32 %v1066, 1.0
          %v1071 = vmin.f32 %v1067, 1.0
          %1072 = vst.msk [vmem:[%s370] sm:$0xff] %vm391, %v1068
          %1073 = vst.msk [vmem:[%s370 + $0x8] sm:$0xff] %vm391, %v1069
          %1074 = vst.msk [vmem:[%s370 + $0x10] sm:$0xff] %vm391, %v1070
          %1075 = vst.msk [vmem:[%s370 + $0x18] sm:$0xff] %vm391, %v1071
        $region76: #{tpu_custom_call.1} parent=43 // pred_fallthru
          _
        %s1076 = sand.u32 %s179, 1
        %s1077 = scalar_lea.sflag [#allocation6], %s1076
        %s1078 = sand.u32 %s179, 1
        %s1079 = smul.addr %s1078, 32
        %s1080 = scalar_lea.vmem [#allocation15], %s1079
        // Predicated region
        $region77: #{tpu_custom_call.1} parent=43 // pred_check
          %p1081 = pneg %p189
        $region78: #{tpu_custom_call.1} parent=43 // pred_check_branch
          %1083 = sbr.rel (%p1081) target = $region80
        $region79: #{tpu_custom_call.1} parent=43 // pred_region
          #allocation17 [shape = 'u32[6]{0}', space=smem, size = 0x18, scoped, tag = 'DMA stride descriptor']
          %1085 = vsyncadd %s1077, 0
          %s1086 = smul.addr %s30, 2
          %s1087 = smul.addr %s1086, 8
          %s1088 = scalar_lea.hbm %s6, %s1087
          %s1090 = sshll.u32 1, 14
          %s1091 = sxor.u32 4294967295, %s1090
          %s1094 = sshll.u32 7, 18
          %s1095 = sxor.u32 4294967295, %s1094
          %s1096 = sand.u32 0, %s1095
          %s1098 = sor.u32 %s1096, 0
          %s1099 = sshll.u32 %s1080, 4
          %s1100 = int_to_ptr.vmem [resolvable:$true] %s1099
          %s1101 = sshll.u32 %s1088, 4
          %s1102 = int_to_ptr.hbm [resolvable:$true] %s1101
          %1108 = sst [smem:[#allocation17]] 256
          %s1109 = scalar_lea.smem [#allocation17], 1
          %1110 = sst [smem:[%s1109]] 1024
          %s1111 = scalar_lea.smem [#allocation17], 2
          %1112 = sst [smem:[%s1111]] 2
          %s1113 = scalar_lea.smem [#allocation17], 3
          %1114 = sst [smem:[%s1113]] 128
          %s1115 = scalar_lea.smem [#allocation17], 4
          %1116 = sst [smem:[%s1115]] 128
          %s1117 = scalar_lea.smem [#allocation17], 5
          %1118 = sst [smem:[%s1117]] 8
          %1120 = dma.general %s1100, 512, %s1102, %s1077, [#allocation16], [#allocation17], %s1098, 0
        $region80: #{tpu_custom_call.1} parent=43 // pred_fallthru
          _
      $region44: #{tpu_custom_call.1} parent=5 // pred_fallthru
        _
      %p1121 = scmp.le.s32.totalorder 2, %s21
      // Predicated region
      $region81: #{tpu_custom_call.1} parent=5 // pred_check
        %p1122 = pneg %p1121
      $region82: #{tpu_custom_call.1} parent=5 // pred_check_branch
        %1124 = sbr.rel (%p1122) target = $region84
      $region83: #{tpu_custom_call.1} parent=5 // pred_region
        %s1125 = ssub.s32 %s21, 2
        // Predicated region
        $region85: #{tpu_custom_call.1} parent=83 // pred_check
          %p1126 = pneg %p195
        $region86: #{tpu_custom_call.1} parent=83 // pred_check_branch
          %1128 = sbr.rel (%p1126) target = $region88
        $region87: #{tpu_custom_call.1} parent=83 // pred_region
          %s1129 = sand.u32 %s180, 1
          %s1130 = scalar_lea.sflag [#allocation6], %s1129
          %s1131 = sand.u32 %s180, 1
          %s1132 = smul.addr %s1131, 32
          %s1133 = scalar_lea.vmem [#allocation15], %s1132
          %1135 = dma.done %s1130, 512
        $region88: #{tpu_custom_call.1} parent=83 // pred_fallthru
          _
      $region84: #{tpu_custom_call.1} parent=5 // pred_fallthru
        _
    $region6: #{tpu_custom_call.1} parent=1 // loop_footer
      %s25 = sadd.s32 1, %s21
    $region7: #{tpu_custom_call.1} parent=1 // loop_footer_branch
      %20 = sbr.rel target = $region3
    $region8: #{tpu_custom_call.1} parent=1 // loop_exit
      _
    %1136 = vsyncpa [#allocation5], 1
    %s1137 = scalar_lea.sflag [#allocation5], 1
    %1138 = vsyncpa %s1137, 1
    %1139 = vsyncpa [#allocation8], 1
    %1140 = vsyncpa [#allocation11], 1
    %1141 = vsyncpa [#allocation14], 1
    %1142 = vsyncpa [#allocation6], 1
    %s1143 = scalar_lea.sflag [#allocation6], 1
    %1144 = vsyncpa %s1143, 1

</llo_original>
